<compile_context>
chip_gen: v5e
topology: v5e:2x2
jax: 0.10.0
libtpu: 0.0.40
codegen_flags: <defaults>
</compile_context>

<pallas_src>
import functools

import jax
import jax.numpy as jnp
from jax import lax
from jax.experimental import pallas as pl
from jax.experimental.pallas import tpu as pltpu

INPUT_DIM = 13
HIDDEN_DIM = 64
NUM_LAYERS = 2          # hard-wired to 2 in the kernel below
OUTPUT_DIM = 2
OUT_PAD = 128           # pad the 2-class output to a full 128-lane vreg
GATE_DIM = 4 * HIDDEN_DIM


def audio_lstm_kernel(proj_ref,                    # (tT, B_pad, 4H)  streamed
                      whh0_ref,                    # (H, 4H)          resident
                      wih1_ref, whh1_ref, b1_ref,  # layer-1 weights  resident
                      wfc_ref, bfc_ref,            # fc (padded)      resident
                      out_ref,                     # (B_pad, OUT_PAD)
                      h0_ref, c0_ref, h1_ref, c1_ref,   # VMEM carry scratch
                      *, t_total, t_blk, mask_tail):
    H = HIDDEN_DIM
    blk = pl.program_id(0)
    B = h0_ref.shape[0]

    @pl.when(blk == 0)
    def _init():
        z = jnp.zeros((B, H), jnp.float32)
        h0_ref[...] = z
        c0_ref[...] = z
        h1_ref[...] = z
        c1_ref[...] = z

    # Hoisted loads / broadcasts (once per time block, not per timestep).
    whh0 = whh0_ref[...]
    wih1 = wih1_ref[...]
    whh1 = whh1_ref[...]
    b1 = jnp.broadcast_to(b1_ref[...], (B, GATE_DIM))

    def gates_to_hc(gates, c):
        # PyTorch gate order: i, f, g, o
        i = jax.nn.sigmoid(gates[:, 0 * H:1 * H])
        f = jax.nn.sigmoid(gates[:, 1 * H:2 * H])
        g = jnp.tanh(gates[:, 2 * H:3 * H])
        o = jax.nn.sigmoid(gates[:, 3 * H:4 * H])
        c_new = f * c + i * g
        h_new = o * jnp.tanh(c_new)
        return h_new, c_new

    def step(lt, carry):
        h0, c0, h1, c1 = carry
        # layer 0: input projection was precomputed; only the recurrent dot.
        gates0 = proj_ref[lt] + jnp.dot(h0, whh0,
                                        preferred_element_type=jnp.float32)
        h0n, c0n = gates_to_hc(gates0, c0)
        # layer 1: two independent dots (pipeline on the MXU) + hoisted bias.
        gates1 = (jnp.dot(h0n, wih1, preferred_element_type=jnp.float32)
                  + jnp.dot(h1, whh1, preferred_element_type=jnp.float32)
                  + b1)
        h1n, c1n = gates_to_hc(gates1, c1)
        if mask_tail:
            # only the final (partial) time block has padded timesteps
            valid = (blk * t_blk + lt) < t_total
            h0n = jnp.where(valid, h0n, h0)
            c0n = jnp.where(valid, c0n, c0)
            h1n = jnp.where(valid, h1n, h1)
            c1n = jnp.where(valid, c1n, c1)
        return h0n, c0n, h1n, c1n

    carry0 = (h0_ref[...], c0_ref[...], h1_ref[...], c1_ref[...])
    h0, c0, h1, c1 = lax.fori_loop(0, t_blk, step, carry0, unroll=True)
    h0_ref[...] = h0
    c0_ref[...] = c0
    h1_ref[...] = h1
    c1_ref[...] = c1

    @pl.when(blk == pl.num_programs(0) - 1)
    def _finalize():
        # fc on the last hidden state; classes padded to 128 lanes with a
        # large-negative bias so log-softmax over 128 lanes == over 2 classes.
        logits = (jnp.dot(h1, wfc_ref[...], preferred_element_type=jnp.float32)
                  + bfc_ref[...])
        m = jnp.max(logits, axis=1, keepdims=True)
        shifted = logits - m
        lse = jnp.log(jnp.sum(jnp.exp(shifted), axis=1, keepdims=True))
        out_ref[...] = (shifted - lse).astype(out_ref.dtype)


@jax.jit
def audio_lstm_forward(x, params):
    """x: (B, T, INPUT_DIM) float32 (PyTorch batch_first convention)."""
    B, T, D = x.shape
    assert D == INPUT_DIM

    (w_ih0, w_hh0, b_ih0, b_hh0,
     w_ih1, w_hh1, b_ih1, b_hh1,
     w_fc, b_fc) = params

    # pad batch to a multiple of 8 sublanes; pick a time block and pad T.
    B_pad = ((B + 7) // 8) * 8
    t_blk = min(T, 16)
    n_blk = -(-T // t_blk)
    T_pad = n_blk * t_blk
    mask_tail = (T_pad != T)

    x_p = jnp.pad(x.astype(jnp.float32),
                  ((0, B_pad - B), (0, T_pad - T), (0, 0)))       # (B_pad, T_pad, 13)

    # Precompute the layer-0 input projection for all timesteps in one big,
    # well-utilized matmul (bias folded in). Time-major for the kernel.
    proj0 = jnp.einsum('btd,gd->btg', x_p, w_ih0) + (b_ih0 + b_hh0)  # (B_pad, T_pad, 4H)
    proj0 = jnp.transpose(proj0, (1, 0, 2))                          # (T_pad, B_pad, 4H)

    # Pre-transposed weights (in, out).
    whh0_t = w_hh0.T                                                 # (H, 4H)
    wih1_t = w_ih1.T                                                 # (H, 4H)
    whh1_t = w_hh1.T                                                 # (H, 4H)
    b1 = (b_ih1 + b_hh1).reshape(1, GATE_DIM)
    wfc_t = jnp.pad(w_fc.T, ((0, 0), (0, OUT_PAD - OUTPUT_DIM)))     # (H, OUT_PAD)
    bfc = jnp.full((1, OUT_PAD), -1e30, jnp.float32)
    bfc = bfc.at[0, :OUTPUT_DIM].set(b_fc)

    kernel = functools.partial(audio_lstm_kernel,
                               t_total=T, t_blk=t_blk, mask_tail=mask_tail)

    out = pl.pallas_call(
        kernel,
        out_shape=jax.ShapeDtypeStruct((B_pad, OUT_PAD), jnp.float32),
        grid_spec=pltpu.PrefetchScalarGridSpec(
            num_scalar_prefetch=0,
            grid=(n_blk,),
            in_specs=[
                # streamed over the time grid (auto double-buffered DMA)
                pl.BlockSpec((t_blk, B_pad, GATE_DIM), lambda t: (t, 0, 0)),
                # weights: resident (constant index_map)
                pl.BlockSpec((HIDDEN_DIM, GATE_DIM), lambda t: (0, 0)),
                pl.BlockSpec((HIDDEN_DIM, GATE_DIM), lambda t: (0, 0)),
                pl.BlockSpec((HIDDEN_DIM, GATE_DIM), lambda t: (0, 0)),
                pl.BlockSpec((1, GATE_DIM), lambda t: (0, 0)),
                pl.BlockSpec((HIDDEN_DIM, OUT_PAD), lambda t: (0, 0)),
                pl.BlockSpec((1, OUT_PAD), lambda t: (0, 0)),
            ],
            out_specs=pl.BlockSpec((B_pad, OUT_PAD), lambda t: (0, 0)),
            scratch_shapes=[pltpu.VMEM((B_pad, HIDDEN_DIM), jnp.float32)] * 4,
        ),
        compiler_params=pltpu.CompilerParams(
            dimension_semantics=("arbitrary",),      # serial recurrence axis
            vmem_limit_bytes=32 * 1024 * 1024,       # safe on v5e/v6e/v7x
        ),
    )(proj0, whh0_t, wih1_t, whh1_t, b1, wfc_t, bfc)

    return out[:B, :OUTPUT_DIM]


def init_params(key):
    """Deterministic param init (PyTorch LSTM/Linear uniform(-1/sqrt(H), 1/sqrt(H)))."""
    H = HIDDEN_DIM
    bound = 1.0 / jnp.sqrt(jnp.float32(H))
    keys = jax.random.split(key, 10)

    def u(k, shape):
        return jax.random.uniform(k, shape, jnp.float32, -bound, bound)

    w_ih0 = u(keys[0], (4 * H, INPUT_DIM))
    w_hh0 = u(keys[1], (4 * H, H))
    b_ih0 = u(keys[2], (4 * H,))
    b_hh0 = u(keys[3], (4 * H,))
    w_ih1 = u(keys[4], (4 * H, H))
    w_hh1 = u(keys[5], (4 * H, H))
    b_ih1 = u(keys[6], (4 * H,))
    b_hh1 = u(keys[7], (4 * H,))
    w_fc = u(keys[8], (OUTPUT_DIM, H))
    b_fc = u(keys[9], (OUTPUT_DIM,))
    return (w_ih0, w_hh0, b_ih0, b_hh0,
            w_ih1, w_hh1, b_ih1, b_hh1,
            w_fc, b_fc)


def reference_forward(x, params):
    """Pure-JAX reference matching torch.nn.LSTM(batch_first) + Linear + LogSoftmax."""
    (w_ih0, w_hh0, b_ih0, b_hh0,
     w_ih1, w_hh1, b_ih1, b_hh1,
     w_fc, b_fc) = params
    B, T, _ = x.shape
    H = HIDDEN_DIM

    def cell(x_t, h, c, w_ih, w_hh, b_ih, b_hh):
        gates = x_t @ w_ih.T + h @ w_hh.T + b_ih + b_hh
        i = jax.nn.sigmoid(gates[:, 0 * H:1 * H])
        f = jax.nn.sigmoid(gates[:, 1 * H:2 * H])
        g = jnp.tanh(gates[:, 2 * H:3 * H])
        o = jax.nn.sigmoid(gates[:, 3 * H:4 * H])
        c = f * c + i * g
        h = o * jnp.tanh(c)
        return h, c

    h0 = c0 = h1 = c1 = jnp.zeros((B, H), jnp.float32)
    for t in range(T):
        h0, c0 = cell(x[:, t, :], h0, c0, w_ih0, w_hh0, b_ih0, b_hh0)
        h1, c1 = cell(h0, h1, c1, w_ih1, w_hh1, b_ih1, b_hh1)
    logits = h1 @ w_fc.T + b_fc
    return jax.nn.log_softmax(logits, axis=1)


if __name__ == "__main__":
    key = jax.random.PRNGKey(0)
    pkey, xkey = jax.random.split(key)

    B, T = 2, 8
    params = init_params(pkey)
    x = jax.random.normal(xkey, (B, T, INPUT_DIM), jnp.float32)

    out = audio_lstm_forward(x, params)
    out = jax.block_until_ready(out)

    ref = reference_forward(x, params)
    assert out.shape == (B, OUTPUT_DIM)
    assert jnp.allclose(out, ref, atol=1e-4, rtol=1e-4), (out, ref)

    print("KERNEL_OK")
</pallas_src>

<mosaic_0001>
module attributes {stable_mosaic.version = 11 : i64} {
  func.func @audio_lstm_kernel(%arg0: i32, %arg1: memref<8x8x256xf32, #tpu.memory_space<vmem>>, %arg2: memref<64x256xf32, #tpu.memory_space<vmem>>, %arg3: memref<64x256xf32, #tpu.memory_space<vmem>>, %arg4: memref<64x256xf32, #tpu.memory_space<vmem>>, %arg5: memref<1x256xf32, #tpu.memory_space<vmem>>, %arg6: memref<64x128xf32, #tpu.memory_space<vmem>>, %arg7: memref<1x128xf32, #tpu.memory_space<vmem>>, %arg8: memref<8x128xf32, #tpu.memory_space<vmem>>, %arg9: memref<8x64xf32, #tpu.memory_space<vmem>>, %arg10: memref<8x64xf32, #tpu.memory_space<vmem>>, %arg11: memref<8x64xf32, #tpu.memory_space<vmem>>, %arg12: memref<8x64xf32, #tpu.memory_space<vmem>>) attributes {dimension_semantics = [#tpu.dimension_semantics<arbitrary>], iteration_bounds = array<i64: 1>, scalar_prefetch = 0 : i64, scratch_operands = 4 : i64, tpu.core_type = #tpu.core_type<tc>, window_params = [{transform_indices = @transform_0, window_bounds = array<i64: 8, 8, 256>}, {pipeline_mode = #tpu.pipeline_mode<synchronous>, transform_indices = @transform_1, window_bounds = array<i64: 64, 256>}, {pipeline_mode = #tpu.pipeline_mode<synchronous>, transform_indices = @transform_2, window_bounds = array<i64: 64, 256>}, {pipeline_mode = #tpu.pipeline_mode<synchronous>, transform_indices = @transform_3, window_bounds = array<i64: 64, 256>}, {pipeline_mode = #tpu.pipeline_mode<synchronous>, transform_indices = @transform_4, window_bounds = array<i64: 1, 256>}, {pipeline_mode = #tpu.pipeline_mode<synchronous>, transform_indices = @transform_5, window_bounds = array<i64: 64, 128>}, {pipeline_mode = #tpu.pipeline_mode<synchronous>, transform_indices = @transform_6, window_bounds = array<i64: 1, 128>}, {pipeline_mode = #tpu.pipeline_mode<synchronous>, transform_indices = @transform_7, window_bounds = array<i64: 8, 128>}]} {
    %c0_i32 = arith.constant 0 : i32
    %0 = arith.cmpi eq, %arg0, %c0_i32 : i32
    %1 = arith.extui %0 : i1 to i32
    %c0_i32_0 = arith.constant 0 : i32
    %2 = arith.cmpi ne, %1, %c0_i32_0 : i32
    scf.if %2 {
      %cst_114 = arith.constant 0.000000e+00 : f32
      %492 = vector.broadcast %cst_114 : f32 to vector<8x64xf32>
      %c0_115 = arith.constant 0 : index
      %c0_116 = arith.constant 0 : index
      %493 = vector.load %arg9[%c0_115, %c0_116] : memref<8x64xf32, #tpu.memory_space<vmem>>, vector<8x64xf32>
      tpu.vector_store %arg9[%c0_115, %c0_116], %492 {strides = array<i32>} : memref<8x64xf32, #tpu.memory_space<vmem>>, vector<8x64xf32>,
      %c0_117 = arith.constant 0 : index
      %c0_118 = arith.constant 0 : index
      %494 = vector.load %arg10[%c0_117, %c0_118] : memref<8x64xf32, #tpu.memory_space<vmem>>, vector<8x64xf32>
      tpu.vector_store %arg10[%c0_117, %c0_118], %492 {strides = array<i32>} : memref<8x64xf32, #tpu.memory_space<vmem>>, vector<8x64xf32>,
      %c0_119 = arith.constant 0 : index
      %c0_120 = arith.constant 0 : index
      %495 = vector.load %arg11[%c0_119, %c0_120] : memref<8x64xf32, #tpu.memory_space<vmem>>, vector<8x64xf32>
      tpu.vector_store %arg11[%c0_119, %c0_120], %492 {strides = array<i32>} : memref<8x64xf32, #tpu.memory_space<vmem>>, vector<8x64xf32>,
      %c0_121 = arith.constant 0 : index
      %c0_122 = arith.constant 0 : index
      %496 = vector.load %arg12[%c0_121, %c0_122] : memref<8x64xf32, #tpu.memory_space<vmem>>, vector<8x64xf32>
      tpu.vector_store %arg12[%c0_121, %c0_122], %492 {strides = array<i32>} : memref<8x64xf32, #tpu.memory_space<vmem>>, vector<8x64xf32>,
    } else {
    }
    %c0 = arith.constant 0 : index
    %c0_1 = arith.constant 0 : index
    %3 = vector.load %arg2[%c0, %c0_1] : memref<64x256xf32, #tpu.memory_space<vmem>>, vector<64x256xf32>
    %c0_2 = arith.constant 0 : index
    %c0_3 = arith.constant 0 : index
    %4 = vector.load %arg3[%c0_2, %c0_3] : memref<64x256xf32, #tpu.memory_space<vmem>>, vector<64x256xf32>
    %c0_4 = arith.constant 0 : index
    %c0_5 = arith.constant 0 : index
    %5 = vector.load %arg4[%c0_4, %c0_5] : memref<64x256xf32, #tpu.memory_space<vmem>>, vector<64x256xf32>
    %c0_6 = arith.constant 0 : index
    %c0_7 = arith.constant 0 : index
    %6 = vector.load %arg5[%c0_6, %c0_7] : memref<1x256xf32, #tpu.memory_space<vmem>>, vector<1x256xf32>
    %7 = vector.shape_cast %6 : vector<1x256xf32> to vector<1x256xf32>
    %8 = vector.broadcast %7 : vector<1x256xf32> to vector<8x256xf32>
    %c0_8 = arith.constant 0 : index
    %c0_9 = arith.constant 0 : index
    %9 = vector.load %arg9[%c0_8, %c0_9] : memref<8x64xf32, #tpu.memory_space<vmem>>, vector<8x64xf32>
    %c0_10 = arith.constant 0 : index
    %c0_11 = arith.constant 0 : index
    %10 = vector.load %arg10[%c0_10, %c0_11] : memref<8x64xf32, #tpu.memory_space<vmem>>, vector<8x64xf32>
    %c0_12 = arith.constant 0 : index
    %c0_13 = arith.constant 0 : index
    %11 = vector.load %arg11[%c0_12, %c0_13] : memref<8x64xf32, #tpu.memory_space<vmem>>, vector<8x64xf32>
    %c0_14 = arith.constant 0 : index
    %c0_15 = arith.constant 0 : index
    %12 = vector.load %arg12[%c0_14, %c0_15] : memref<8x64xf32, #tpu.memory_space<vmem>>, vector<8x64xf32>
    %c0_i32_16 = arith.constant 0 : i32
    %13 = arith.index_cast %c0_i32_16 : i32 to index
    %c0_17 = arith.constant 0 : index
    %c0_18 = arith.constant 0 : index
    %14 = vector.load %arg1[%13, %c0_17, %c0_18] : memref<8x8x256xf32, #tpu.memory_space<vmem>>, vector<1x8x256xf32>
    %15 = vector.shape_cast %14 : vector<1x8x256xf32> to vector<8x256xf32>
    %cst = arith.constant dense<0.000000e+00> : vector<8x256xf32>
    %16 = tpu.matmul %9, %3, %cst {dimension_numbers = #tpu.dot_dimension_numbers<[1], [0], [0], [1], [0, 0, 1, 1], [], []>} : vector<8x64xf32>, vector<64x256xf32>, vector<8x256xf32> -> vector<8x256xf32>
    %17 = arith.addf %15, %16 : vector<8x256xf32>
    %18 = vector.extract_strided_slice %17 {offsets = [0, 0], sizes = [8, 64], strides = [1, 1]} : vector<8x256xf32> to vector<8x64xf32>
    %19 = arith.negf %18 : vector<8x64xf32>
    %20 = math.exp %19 : vector<8x64xf32>
    %cst_19 = arith.constant 1.000000e+00 : f32
    %21 = vector.broadcast %cst_19 : f32 to vector<8x64xf32>
    %22 = arith.addf %21, %20 : vector<8x64xf32>
    %23 = arith.divf %21, %22 : vector<8x64xf32>
    %24 = vector.extract_strided_slice %17 {offsets = [0, 64], sizes = [8, 64], strides = [1, 1]} : vector<8x256xf32> to vector<8x64xf32>
    %25 = arith.negf %24 : vector<8x64xf32>
    %26 = math.exp %25 : vector<8x64xf32>
    %cst_20 = arith.constant 1.000000e+00 : f32
    %27 = vector.broadcast %cst_20 : f32 to vector<8x64xf32>
    %28 = arith.addf %27, %26 : vector<8x64xf32>
    %29 = arith.divf %27, %28 : vector<8x64xf32>
    %30 = vector.extract_strided_slice %17 {offsets = [0, 128], sizes = [8, 64], strides = [1, 1]} : vector<8x256xf32> to vector<8x64xf32>
    %31 = math.tanh %30 : vector<8x64xf32>
    %32 = vector.extract_strided_slice %17 {offsets = [0, 192], sizes = [8, 64], strides = [1, 1]} : vector<8x256xf32> to vector<8x64xf32>
    %33 = arith.negf %32 : vector<8x64xf32>
    %34 = math.exp %33 : vector<8x64xf32>
    %cst_21 = arith.constant 1.000000e+00 : f32
    %35 = vector.broadcast %cst_21 : f32 to vector<8x64xf32>
    %36 = arith.addf %35, %34 : vector<8x64xf32>
    %37 = arith.divf %35, %36 : vector<8x64xf32>
    %38 = arith.mulf %29, %10 : vector<8x64xf32>
    %39 = arith.mulf %23, %31 : vector<8x64xf32>
    %40 = arith.addf %38, %39 : vector<8x64xf32>
    %41 = math.tanh %40 : vector<8x64xf32>
    %42 = arith.mulf %37, %41 : vector<8x64xf32>
    %cst_22 = arith.constant dense<0.000000e+00> : vector<8x256xf32>
    %43 = tpu.matmul %42, %4, %cst_22 {dimension_numbers = #tpu.dot_dimension_numbers<[1], [0], [0], [1], [0, 0, 1, 1], [], []>} : vector<8x64xf32>, vector<64x256xf32>, vector<8x256xf32> -> vector<8x256xf32>
    %cst_23 = arith.constant dense<0.000000e+00> : vector<8x256xf32>
    %44 = tpu.matmul %11, %5, %cst_23 {dimension_numbers = #tpu.dot_dimension_numbers<[1], [0], [0], [1], [0, 0, 1, 1], [], []>} : vector<8x64xf32>, vector<64x256xf32>, vector<8x256xf32> -> vector<8x256xf32>
    %45 = arith.addf %43, %44 : vector<8x256xf32>
    %46 = arith.addf %45, %8 : vector<8x256xf32>
    %47 = vector.extract_strided_slice %46 {offsets = [0, 0], sizes = [8, 64], strides = [1, 1]} : vector<8x256xf32> to vector<8x64xf32>
    %48 = arith.negf %47 : vector<8x64xf32>
    %49 = math.exp %48 : vector<8x64xf32>
    %cst_24 = arith.constant 1.000000e+00 : f32
    %50 = vector.broadcast %cst_24 : f32 to vector<8x64xf32>
    %51 = arith.addf %50, %49 : vector<8x64xf32>
    %52 = arith.divf %50, %51 : vector<8x64xf32>
    %53 = vector.extract_strided_slice %46 {offsets = [0, 64], sizes = [8, 64], strides = [1, 1]} : vector<8x256xf32> to vector<8x64xf32>
    %54 = arith.negf %53 : vector<8x64xf32>
    %55 = math.exp %54 : vector<8x64xf32>
    %cst_25 = arith.constant 1.000000e+00 : f32
    %56 = vector.broadcast %cst_25 : f32 to vector<8x64xf32>
    %57 = arith.addf %56, %55 : vector<8x64xf32>
    %58 = arith.divf %56, %57 : vector<8x64xf32>
    %59 = vector.extract_strided_slice %46 {offsets = [0, 128], sizes = [8, 64], strides = [1, 1]} : vector<8x256xf32> to vector<8x64xf32>
    %60 = math.tanh %59 : vector<8x64xf32>
    %61 = vector.extract_strided_slice %46 {offsets = [0, 192], sizes = [8, 64], strides = [1, 1]} : vector<8x256xf32> to vector<8x64xf32>
    %62 = arith.negf %61 : vector<8x64xf32>
    %63 = math.exp %62 : vector<8x64xf32>
    %cst_26 = arith.constant 1.000000e+00 : f32
    %64 = vector.broadcast %cst_26 : f32 to vector<8x64xf32>
    %65 = arith.addf %64, %63 : vector<8x64xf32>
    %66 = arith.divf %64, %65 : vector<8x64xf32>
    %67 = arith.mulf %58, %12 : vector<8x64xf32>
    %68 = arith.mulf %52, %60 : vector<8x64xf32>
    %69 = arith.addf %67, %68 : vector<8x64xf32>
    %70 = math.tanh %69 : vector<8x64xf32>
    %71 = arith.mulf %66, %70 : vector<8x64xf32>
    %c1_i32 = arith.constant 1 : i32
    %72 = arith.index_cast %c1_i32 : i32 to index
    %c0_27 = arith.constant 0 : index
    %c0_28 = arith.constant 0 : index
    %73 = vector.load %arg1[%72, %c0_27, %c0_28] : memref<8x8x256xf32, #tpu.memory_space<vmem>>, vector<1x8x256xf32>
    %74 = vector.shape_cast %73 : vector<1x8x256xf32> to vector<8x256xf32>
    %cst_29 = arith.constant dense<0.000000e+00> : vector<8x256xf32>
    %75 = tpu.matmul %42, %3, %cst_29 {dimension_numbers = #tpu.dot_dimension_numbers<[1], [0], [0], [1], [0, 0, 1, 1], [], []>} : vector<8x64xf32>, vector<64x256xf32>, vector<8x256xf32> -> vector<8x256xf32>
    %76 = arith.addf %74, %75 : vector<8x256xf32>
    %77 = vector.extract_strided_slice %76 {offsets = [0, 0], sizes = [8, 64], strides = [1, 1]} : vector<8x256xf32> to vector<8x64xf32>
    %78 = arith.negf %77 : vector<8x64xf32>
    %79 = math.exp %78 : vector<8x64xf32>
    %cst_30 = arith.constant 1.000000e+00 : f32
    %80 = vector.broadcast %cst_30 : f32 to vector<8x64xf32>
    %81 = arith.addf %80, %79 : vector<8x64xf32>
    %82 = arith.divf %80, %81 : vector<8x64xf32>
    %83 = vector.extract_strided_slice %76 {offsets = [0, 64], sizes = [8, 64], strides = [1, 1]} : vector<8x256xf32> to vector<8x64xf32>
    %84 = arith.negf %83 : vector<8x64xf32>
    %85 = math.exp %84 : vector<8x64xf32>
    %cst_31 = arith.constant 1.000000e+00 : f32
    %86 = vector.broadcast %cst_31 : f32 to vector<8x64xf32>
    %87 = arith.addf %86, %85 : vector<8x64xf32>
    %88 = arith.divf %86, %87 : vector<8x64xf32>
    %89 = vector.extract_strided_slice %76 {offsets = [0, 128], sizes = [8, 64], strides = [1, 1]} : vector<8x256xf32> to vector<8x64xf32>
    %90 = math.tanh %89 : vector<8x64xf32>
    %91 = vector.extract_strided_slice %76 {offsets = [0, 192], sizes = [8, 64], strides = [1, 1]} : vector<8x256xf32> to vector<8x64xf32>
    %92 = arith.negf %91 : vector<8x64xf32>
    %93 = math.exp %92 : vector<8x64xf32>
    %cst_32 = arith.constant 1.000000e+00 : f32
    %94 = vector.broadcast %cst_32 : f32 to vector<8x64xf32>
    %95 = arith.addf %94, %93 : vector<8x64xf32>
    %96 = arith.divf %94, %95 : vector<8x64xf32>
    %97 = arith.mulf %88, %40 : vector<8x64xf32>
    %98 = arith.mulf %82, %90 : vector<8x64xf32>
    %99 = arith.addf %97, %98 : vector<8x64xf32>
    %100 = math.tanh %99 : vector<8x64xf32>
    %101 = arith.mulf %96, %100 : vector<8x64xf32>
    %cst_33 = arith.constant dense<0.000000e+00> : vector<8x256xf32>
    %102 = tpu.matmul %101, %4, %cst_33 {dimension_numbers = #tpu.dot_dimension_numbers<[1], [0], [0], [1], [0, 0, 1, 1], [], []>} : vector<8x64xf32>, vector<64x256xf32>, vector<8x256xf32> -> vector<8x256xf32>
    %cst_34 = arith.constant dense<0.000000e+00> : vector<8x256xf32>
    %103 = tpu.matmul %71, %5, %cst_34 {dimension_numbers = #tpu.dot_dimension_numbers<[1], [0], [0], [1], [0, 0, 1, 1], [], []>} : vector<8x64xf32>, vector<64x256xf32>, vector<8x256xf32> -> vector<8x256xf32>
    %104 = arith.addf %102, %103 : vector<8x256xf32>
    %105 = arith.addf %104, %8 : vector<8x256xf32>
    %106 = vector.extract_strided_slice %105 {offsets = [0, 0], sizes = [8, 64], strides = [1, 1]} : vector<8x256xf32> to vector<8x64xf32>
    %107 = arith.negf %106 : vector<8x64xf32>
    %108 = math.exp %107 : vector<8x64xf32>
    %cst_35 = arith.constant 1.000000e+00 : f32
    %109 = vector.broadcast %cst_35 : f32 to vector<8x64xf32>
    %110 = arith.addf %109, %108 : vector<8x64xf32>
    %111 = arith.divf %109, %110 : vector<8x64xf32>
    %112 = vector.extract_strided_slice %105 {offsets = [0, 64], sizes = [8, 64], strides = [1, 1]} : vector<8x256xf32> to vector<8x64xf32>
    %113 = arith.negf %112 : vector<8x64xf32>
    %114 = math.exp %113 : vector<8x64xf32>
    %cst_36 = arith.constant 1.000000e+00 : f32
    %115 = vector.broadcast %cst_36 : f32 to vector<8x64xf32>
    %116 = arith.addf %115, %114 : vector<8x64xf32>
    %117 = arith.divf %115, %116 : vector<8x64xf32>
    %118 = vector.extract_strided_slice %105 {offsets = [0, 128], sizes = [8, 64], strides = [1, 1]} : vector<8x256xf32> to vector<8x64xf32>
    %119 = math.tanh %118 : vector<8x64xf32>
    %120 = vector.extract_strided_slice %105 {offsets = [0, 192], sizes = [8, 64], strides = [1, 1]} : vector<8x256xf32> to vector<8x64xf32>
    %121 = arith.negf %120 : vector<8x64xf32>
    %122 = math.exp %121 : vector<8x64xf32>
    %cst_37 = arith.constant 1.000000e+00 : f32
    %123 = vector.broadcast %cst_37 : f32 to vector<8x64xf32>
    %124 = arith.addf %123, %122 : vector<8x64xf32>
    %125 = arith.divf %123, %124 : vector<8x64xf32>
    %126 = arith.mulf %117, %69 : vector<8x64xf32>
    %127 = arith.mulf %111, %119 : vector<8x64xf32>
    %128 = arith.addf %126, %127 : vector<8x64xf32>
    %129 = math.tanh %128 : vector<8x64xf32>
    %130 = arith.mulf %125, %129 : vector<8x64xf32>
    %c2_i32 = arith.constant 2 : i32
    %131 = arith.index_cast %c2_i32 : i32 to index
    %c0_38 = arith.constant 0 : index
    %c0_39 = arith.constant 0 : index
    %132 = vector.load %arg1[%131, %c0_38, %c0_39] : memref<8x8x256xf32, #tpu.memory_space<vmem>>, vector<1x8x256xf32>
    %133 = vector.shape_cast %132 : vector<1x8x256xf32> to vector<8x256xf32>
    %cst_40 = arith.constant dense<0.000000e+00> : vector<8x256xf32>
    %134 = tpu.matmul %101, %3, %cst_40 {dimension_numbers = #tpu.dot_dimension_numbers<[1], [0], [0], [1], [0, 0, 1, 1], [], []>} : vector<8x64xf32>, vector<64x256xf32>, vector<8x256xf32> -> vector<8x256xf32>
    %135 = arith.addf %133, %134 : vector<8x256xf32>
    %136 = vector.extract_strided_slice %135 {offsets = [0, 0], sizes = [8, 64], strides = [1, 1]} : vector<8x256xf32> to vector<8x64xf32>
    %137 = arith.negf %136 : vector<8x64xf32>
    %138 = math.exp %137 : vector<8x64xf32>
    %cst_41 = arith.constant 1.000000e+00 : f32
    %139 = vector.broadcast %cst_41 : f32 to vector<8x64xf32>
    %140 = arith.addf %139, %138 : vector<8x64xf32>
    %141 = arith.divf %139, %140 : vector<8x64xf32>
    %142 = vector.extract_strided_slice %135 {offsets = [0, 64], sizes = [8, 64], strides = [1, 1]} : vector<8x256xf32> to vector<8x64xf32>
    %143 = arith.negf %142 : vector<8x64xf32>
    %144 = math.exp %143 : vector<8x64xf32>
    %cst_42 = arith.constant 1.000000e+00 : f32
    %145 = vector.broadcast %cst_42 : f32 to vector<8x64xf32>
    %146 = arith.addf %145, %144 : vector<8x64xf32>
    %147 = arith.divf %145, %146 : vector<8x64xf32>
    %148 = vector.extract_strided_slice %135 {offsets = [0, 128], sizes = [8, 64], strides = [1, 1]} : vector<8x256xf32> to vector<8x64xf32>
    %149 = math.tanh %148 : vector<8x64xf32>
    %150 = vector.extract_strided_slice %135 {offsets = [0, 192], sizes = [8, 64], strides = [1, 1]} : vector<8x256xf32> to vector<8x64xf32>
    %151 = arith.negf %150 : vector<8x64xf32>
    %152 = math.exp %151 : vector<8x64xf32>
    %cst_43 = arith.constant 1.000000e+00 : f32
    %153 = vector.broadcast %cst_43 : f32 to vector<8x64xf32>
    %154 = arith.addf %153, %152 : vector<8x64xf32>
    %155 = arith.divf %153, %154 : vector<8x64xf32>
    %156 = arith.mulf %147, %99 : vector<8x64xf32>
    %157 = arith.mulf %141, %149 : vector<8x64xf32>
    %158 = arith.addf %156, %157 : vector<8x64xf32>
    %159 = math.tanh %158 : vector<8x64xf32>
    %160 = arith.mulf %155, %159 : vector<8x64xf32>
    %cst_44 = arith.constant dense<0.000000e+00> : vector<8x256xf32>
    %161 = tpu.matmul %160, %4, %cst_44 {dimension_numbers = #tpu.dot_dimension_numbers<[1], [0], [0], [1], [0, 0, 1, 1], [], []>} : vector<8x64xf32>, vector<64x256xf32>, vector<8x256xf32> -> vector<8x256xf32>
    %cst_45 = arith.constant dense<0.000000e+00> : vector<8x256xf32>
    %162 = tpu.matmul %130, %5, %cst_45 {dimension_numbers = #tpu.dot_dimension_numbers<[1], [0], [0], [1], [0, 0, 1, 1], [], []>} : vector<8x64xf32>, vector<64x256xf32>, vector<8x256xf32> -> vector<8x256xf32>
    %163 = arith.addf %161, %162 : vector<8x256xf32>
    %164 = arith.addf %163, %8 : vector<8x256xf32>
    %165 = vector.extract_strided_slice %164 {offsets = [0, 0], sizes = [8, 64], strides = [1, 1]} : vector<8x256xf32> to vector<8x64xf32>
    %166 = arith.negf %165 : vector<8x64xf32>
    %167 = math.exp %166 : vector<8x64xf32>
    %cst_46 = arith.constant 1.000000e+00 : f32
    %168 = vector.broadcast %cst_46 : f32 to vector<8x64xf32>
    %169 = arith.addf %168, %167 : vector<8x64xf32>
    %170 = arith.divf %168, %169 : vector<8x64xf32>
    %171 = vector.extract_strided_slice %164 {offsets = [0, 64], sizes = [8, 64], strides = [1, 1]} : vector<8x256xf32> to vector<8x64xf32>
    %172 = arith.negf %171 : vector<8x64xf32>
    %173 = math.exp %172 : vector<8x64xf32>
    %cst_47 = arith.constant 1.000000e+00 : f32
    %174 = vector.broadcast %cst_47 : f32 to vector<8x64xf32>
    %175 = arith.addf %174, %173 : vector<8x64xf32>
    %176 = arith.divf %174, %175 : vector<8x64xf32>
    %177 = vector.extract_strided_slice %164 {offsets = [0, 128], sizes = [8, 64], strides = [1, 1]} : vector<8x256xf32> to vector<8x64xf32>
    %178 = math.tanh %177 : vector<8x64xf32>
    %179 = vector.extract_strided_slice %164 {offsets = [0, 192], sizes = [8, 64], strides = [1, 1]} : vector<8x256xf32> to vector<8x64xf32>
    %180 = arith.negf %179 : vector<8x64xf32>
    %181 = math.exp %180 : vector<8x64xf32>
    %cst_48 = arith.constant 1.000000e+00 : f32
    %182 = vector.broadcast %cst_48 : f32 to vector<8x64xf32>
    %183 = arith.addf %182, %181 : vector<8x64xf32>
    %184 = arith.divf %182, %183 : vector<8x64xf32>
    %185 = arith.mulf %176, %128 : vector<8x64xf32>
    %186 = arith.mulf %170, %178 : vector<8x64xf32>
    %187 = arith.addf %185, %186 : vector<8x64xf32>
    %188 = math.tanh %187 : vector<8x64xf32>
    %189 = arith.mulf %184, %188 : vector<8x64xf32>
    %c3_i32 = arith.constant 3 : i32
    %190 = arith.index_cast %c3_i32 : i32 to index
    %c0_49 = arith.constant 0 : index
    %c0_50 = arith.constant 0 : index
    %191 = vector.load %arg1[%190, %c0_49, %c0_50] : memref<8x8x256xf32, #tpu.memory_space<vmem>>, vector<1x8x256xf32>
    %192 = vector.shape_cast %191 : vector<1x8x256xf32> to vector<8x256xf32>
    %cst_51 = arith.constant dense<0.000000e+00> : vector<8x256xf32>
    %193 = tpu.matmul %160, %3, %cst_51 {dimension_numbers = #tpu.dot_dimension_numbers<[1], [0], [0], [1], [0, 0, 1, 1], [], []>} : vector<8x64xf32>, vector<64x256xf32>, vector<8x256xf32> -> vector<8x256xf32>
    %194 = arith.addf %192, %193 : vector<8x256xf32>
    %195 = vector.extract_strided_slice %194 {offsets = [0, 0], sizes = [8, 64], strides = [1, 1]} : vector<8x256xf32> to vector<8x64xf32>
    %196 = arith.negf %195 : vector<8x64xf32>
    %197 = math.exp %196 : vector<8x64xf32>
    %cst_52 = arith.constant 1.000000e+00 : f32
    %198 = vector.broadcast %cst_52 : f32 to vector<8x64xf32>
    %199 = arith.addf %198, %197 : vector<8x64xf32>
    %200 = arith.divf %198, %199 : vector<8x64xf32>
    %201 = vector.extract_strided_slice %194 {offsets = [0, 64], sizes = [8, 64], strides = [1, 1]} : vector<8x256xf32> to vector<8x64xf32>
    %202 = arith.negf %201 : vector<8x64xf32>
    %203 = math.exp %202 : vector<8x64xf32>
    %cst_53 = arith.constant 1.000000e+00 : f32
    %204 = vector.broadcast %cst_53 : f32 to vector<8x64xf32>
    %205 = arith.addf %204, %203 : vector<8x64xf32>
    %206 = arith.divf %204, %205 : vector<8x64xf32>
    %207 = vector.extract_strided_slice %194 {offsets = [0, 128], sizes = [8, 64], strides = [1, 1]} : vector<8x256xf32> to vector<8x64xf32>
    %208 = math.tanh %207 : vector<8x64xf32>
    %209 = vector.extract_strided_slice %194 {offsets = [0, 192], sizes = [8, 64], strides = [1, 1]} : vector<8x256xf32> to vector<8x64xf32>
    %210 = arith.negf %209 : vector<8x64xf32>
    %211 = math.exp %210 : vector<8x64xf32>
    %cst_54 = arith.constant 1.000000e+00 : f32
    %212 = vector.broadcast %cst_54 : f32 to vector<8x64xf32>
    %213 = arith.addf %212, %211 : vector<8x64xf32>
    %214 = arith.divf %212, %213 : vector<8x64xf32>
    %215 = arith.mulf %206, %158 : vector<8x64xf32>
    %216 = arith.mulf %200, %208 : vector<8x64xf32>
    %217 = arith.addf %215, %216 : vector<8x64xf32>
    %218 = math.tanh %217 : vector<8x64xf32>
    %219 = arith.mulf %214, %218 : vector<8x64xf32>
    %cst_55 = arith.constant dense<0.000000e+00> : vector<8x256xf32>
    %220 = tpu.matmul %219, %4, %cst_55 {dimension_numbers = #tpu.dot_dimension_numbers<[1], [0], [0], [1], [0, 0, 1, 1], [], []>} : vector<8x64xf32>, vector<64x256xf32>, vector<8x256xf32> -> vector<8x256xf32>
    %cst_56 = arith.constant dense<0.000000e+00> : vector<8x256xf32>
    %221 = tpu.matmul %189, %5, %cst_56 {dimension_numbers = #tpu.dot_dimension_numbers<[1], [0], [0], [1], [0, 0, 1, 1], [], []>} : vector<8x64xf32>, vector<64x256xf32>, vector<8x256xf32> -> vector<8x256xf32>
    %222 = arith.addf %220, %221 : vector<8x256xf32>
    %223 = arith.addf %222, %8 : vector<8x256xf32>
    %224 = vector.extract_strided_slice %223 {offsets = [0, 0], sizes = [8, 64], strides = [1, 1]} : vector<8x256xf32> to vector<8x64xf32>
    %225 = arith.negf %224 : vector<8x64xf32>
    %226 = math.exp %225 : vector<8x64xf32>
    %cst_57 = arith.constant 1.000000e+00 : f32
    %227 = vector.broadcast %cst_57 : f32 to vector<8x64xf32>
    %228 = arith.addf %227, %226 : vector<8x64xf32>
    %229 = arith.divf %227, %228 : vector<8x64xf32>
    %230 = vector.extract_strided_slice %223 {offsets = [0, 64], sizes = [8, 64], strides = [1, 1]} : vector<8x256xf32> to vector<8x64xf32>
    %231 = arith.negf %230 : vector<8x64xf32>
    %232 = math.exp %231 : vector<8x64xf32>
    %cst_58 = arith.constant 1.000000e+00 : f32
    %233 = vector.broadcast %cst_58 : f32 to vector<8x64xf32>
    %234 = arith.addf %233, %232 : vector<8x64xf32>
    %235 = arith.divf %233, %234 : vector<8x64xf32>
    %236 = vector.extract_strided_slice %223 {offsets = [0, 128], sizes = [8, 64], strides = [1, 1]} : vector<8x256xf32> to vector<8x64xf32>
    %237 = math.tanh %236 : vector<8x64xf32>
    %238 = vector.extract_strided_slice %223 {offsets = [0, 192], sizes = [8, 64], strides = [1, 1]} : vector<8x256xf32> to vector<8x64xf32>
    %239 = arith.negf %238 : vector<8x64xf32>
    %240 = math.exp %239 : vector<8x64xf32>
    %cst_59 = arith.constant 1.000000e+00 : f32
    %241 = vector.broadcast %cst_59 : f32 to vector<8x64xf32>
    %242 = arith.addf %241, %240 : vector<8x64xf32>
    %243 = arith.divf %241, %242 : vector<8x64xf32>
    %244 = arith.mulf %235, %187 : vector<8x64xf32>
    %245 = arith.mulf %229, %237 : vector<8x64xf32>
    %246 = arith.addf %244, %245 : vector<8x64xf32>
    %247 = math.tanh %246 : vector<8x64xf32>
    %248 = arith.mulf %243, %247 : vector<8x64xf32>
    %c4_i32 = arith.constant 4 : i32
    %249 = arith.index_cast %c4_i32 : i32 to index
    %c0_60 = arith.constant 0 : index
    %c0_61 = arith.constant 0 : index
    %250 = vector.load %arg1[%249, %c0_60, %c0_61] : memref<8x8x256xf32, #tpu.memory_space<vmem>>, vector<1x8x256xf32>
    %251 = vector.shape_cast %250 : vector<1x8x256xf32> to vector<8x256xf32>
    %cst_62 = arith.constant dense<0.000000e+00> : vector<8x256xf32>
    %252 = tpu.matmul %219, %3, %cst_62 {dimension_numbers = #tpu.dot_dimension_numbers<[1], [0], [0], [1], [0, 0, 1, 1], [], []>} : vector<8x64xf32>, vector<64x256xf32>, vector<8x256xf32> -> vector<8x256xf32>
    %253 = arith.addf %251, %252 : vector<8x256xf32>
    %254 = vector.extract_strided_slice %253 {offsets = [0, 0], sizes = [8, 64], strides = [1, 1]} : vector<8x256xf32> to vector<8x64xf32>
    %255 = arith.negf %254 : vector<8x64xf32>
    %256 = math.exp %255 : vector<8x64xf32>
    %cst_63 = arith.constant 1.000000e+00 : f32
    %257 = vector.broadcast %cst_63 : f32 to vector<8x64xf32>
    %258 = arith.addf %257, %256 : vector<8x64xf32>
    %259 = arith.divf %257, %258 : vector<8x64xf32>
    %260 = vector.extract_strided_slice %253 {offsets = [0, 64], sizes = [8, 64], strides = [1, 1]} : vector<8x256xf32> to vector<8x64xf32>
    %261 = arith.negf %260 : vector<8x64xf32>
    %262 = math.exp %261 : vector<8x64xf32>
    %cst_64 = arith.constant 1.000000e+00 : f32
    %263 = vector.broadcast %cst_64 : f32 to vector<8x64xf32>
    %264 = arith.addf %263, %262 : vector<8x64xf32>
    %265 = arith.divf %263, %264 : vector<8x64xf32>
    %266 = vector.extract_strided_slice %253 {offsets = [0, 128], sizes = [8, 64], strides = [1, 1]} : vector<8x256xf32> to vector<8x64xf32>
    %267 = math.tanh %266 : vector<8x64xf32>
    %268 = vector.extract_strided_slice %253 {offsets = [0, 192], sizes = [8, 64], strides = [1, 1]} : vector<8x256xf32> to vector<8x64xf32>
    %269 = arith.negf %268 : vector<8x64xf32>
    %270 = math.exp %269 : vector<8x64xf32>
    %cst_65 = arith.constant 1.000000e+00 : f32
    %271 = vector.broadcast %cst_65 : f32 to vector<8x64xf32>
    %272 = arith.addf %271, %270 : vector<8x64xf32>
    %273 = arith.divf %271, %272 : vector<8x64xf32>
    %274 = arith.mulf %265, %217 : vector<8x64xf32>
    %275 = arith.mulf %259, %267 : vector<8x64xf32>
    %276 = arith.addf %274, %275 : vector<8x64xf32>
    %277 = math.tanh %276 : vector<8x64xf32>
    %278 = arith.mulf %273, %277 : vector<8x64xf32>
    %cst_66 = arith.constant dense<0.000000e+00> : vector<8x256xf32>
    %279 = tpu.matmul %278, %4, %cst_66 {dimension_numbers = #tpu.dot_dimension_numbers<[1], [0], [0], [1], [0, 0, 1, 1], [], []>} : vector<8x64xf32>, vector<64x256xf32>, vector<8x256xf32> -> vector<8x256xf32>
    %cst_67 = arith.constant dense<0.000000e+00> : vector<8x256xf32>
    %280 = tpu.matmul %248, %5, %cst_67 {dimension_numbers = #tpu.dot_dimension_numbers<[1], [0], [0], [1], [0, 0, 1, 1], [], []>} : vector<8x64xf32>, vector<64x256xf32>, vector<8x256xf32> -> vector<8x256xf32>
    %281 = arith.addf %279, %280 : vector<8x256xf32>
    %282 = arith.addf %281, %8 : vector<8x256xf32>
    %283 = vector.extract_strided_slice %282 {offsets = [0, 0], sizes = [8, 64], strides = [1, 1]} : vector<8x256xf32> to vector<8x64xf32>
    %284 = arith.negf %283 : vector<8x64xf32>
    %285 = math.exp %284 : vector<8x64xf32>
    %cst_68 = arith.constant 1.000000e+00 : f32
    %286 = vector.broadcast %cst_68 : f32 to vector<8x64xf32>
    %287 = arith.addf %286, %285 : vector<8x64xf32>
    %288 = arith.divf %286, %287 : vector<8x64xf32>
    %289 = vector.extract_strided_slice %282 {offsets = [0, 64], sizes = [8, 64], strides = [1, 1]} : vector<8x256xf32> to vector<8x64xf32>
    %290 = arith.negf %289 : vector<8x64xf32>
    %291 = math.exp %290 : vector<8x64xf32>
    %cst_69 = arith.constant 1.000000e+00 : f32
    %292 = vector.broadcast %cst_69 : f32 to vector<8x64xf32>
    %293 = arith.addf %292, %291 : vector<8x64xf32>
    %294 = arith.divf %292, %293 : vector<8x64xf32>
    %295 = vector.extract_strided_slice %282 {offsets = [0, 128], sizes = [8, 64], strides = [1, 1]} : vector<8x256xf32> to vector<8x64xf32>
    %296 = math.tanh %295 : vector<8x64xf32>
    %297 = vector.extract_strided_slice %282 {offsets = [0, 192], sizes = [8, 64], strides = [1, 1]} : vector<8x256xf32> to vector<8x64xf32>
    %298 = arith.negf %297 : vector<8x64xf32>
    %299 = math.exp %298 : vector<8x64xf32>
    %cst_70 = arith.constant 1.000000e+00 : f32
    %300 = vector.broadcast %cst_70 : f32 to vector<8x64xf32>
    %301 = arith.addf %300, %299 : vector<8x64xf32>
    %302 = arith.divf %300, %301 : vector<8x64xf32>
    %303 = arith.mulf %294, %246 : vector<8x64xf32>
    %304 = arith.mulf %288, %296 : vector<8x64xf32>
    %305 = arith.addf %303, %304 : vector<8x64xf32>
    %306 = math.tanh %305 : vector<8x64xf32>
    %307 = arith.mulf %302, %306 : vector<8x64xf32>
    %c5_i32 = arith.constant 5 : i32
    %308 = arith.index_cast %c5_i32 : i32 to index
    %c0_71 = arith.constant 0 : index
    %c0_72 = arith.constant 0 : index
    %309 = vector.load %arg1[%308, %c0_71, %c0_72] : memref<8x8x256xf32, #tpu.memory_space<vmem>>, vector<1x8x256xf32>
    %310 = vector.shape_cast %309 : vector<1x8x256xf32> to vector<8x256xf32>
    %cst_73 = arith.constant dense<0.000000e+00> : vector<8x256xf32>
    %311 = tpu.matmul %278, %3, %cst_73 {dimension_numbers = #tpu.dot_dimension_numbers<[1], [0], [0], [1], [0, 0, 1, 1], [], []>} : vector<8x64xf32>, vector<64x256xf32>, vector<8x256xf32> -> vector<8x256xf32>
    %312 = arith.addf %310, %311 : vector<8x256xf32>
    %313 = vector.extract_strided_slice %312 {offsets = [0, 0], sizes = [8, 64], strides = [1, 1]} : vector<8x256xf32> to vector<8x64xf32>
    %314 = arith.negf %313 : vector<8x64xf32>
    %315 = math.exp %314 : vector<8x64xf32>
    %cst_74 = arith.constant 1.000000e+00 : f32
    %316 = vector.broadcast %cst_74 : f32 to vector<8x64xf32>
    %317 = arith.addf %316, %315 : vector<8x64xf32>
    %318 = arith.divf %316, %317 : vector<8x64xf32>
    %319 = vector.extract_strided_slice %312 {offsets = [0, 64], sizes = [8, 64], strides = [1, 1]} : vector<8x256xf32> to vector<8x64xf32>
    %320 = arith.negf %319 : vector<8x64xf32>
    %321 = math.exp %320 : vector<8x64xf32>
    %cst_75 = arith.constant 1.000000e+00 : f32
    %322 = vector.broadcast %cst_75 : f32 to vector<8x64xf32>
    %323 = arith.addf %322, %321 : vector<8x64xf32>
    %324 = arith.divf %322, %323 : vector<8x64xf32>
    %325 = vector.extract_strided_slice %312 {offsets = [0, 128], sizes = [8, 64], strides = [1, 1]} : vector<8x256xf32> to vector<8x64xf32>
    %326 = math.tanh %325 : vector<8x64xf32>
    %327 = vector.extract_strided_slice %312 {offsets = [0, 192], sizes = [8, 64], strides = [1, 1]} : vector<8x256xf32> to vector<8x64xf32>
    %328 = arith.negf %327 : vector<8x64xf32>
    %329 = math.exp %328 : vector<8x64xf32>
    %cst_76 = arith.constant 1.000000e+00 : f32
    %330 = vector.broadcast %cst_76 : f32 to vector<8x64xf32>
    %331 = arith.addf %330, %329 : vector<8x64xf32>
    %332 = arith.divf %330, %331 : vector<8x64xf32>
    %333 = arith.mulf %324, %276 : vector<8x64xf32>
    %334 = arith.mulf %318, %326 : vector<8x64xf32>
    %335 = arith.addf %333, %334 : vector<8x64xf32>
    %336 = math.tanh %335 : vector<8x64xf32>
    %337 = arith.mulf %332, %336 : vector<8x64xf32>
    %cst_77 = arith.constant dense<0.000000e+00> : vector<8x256xf32>
    %338 = tpu.matmul %337, %4, %cst_77 {dimension_numbers = #tpu.dot_dimension_numbers<[1], [0], [0], [1], [0, 0, 1, 1], [], []>} : vector<8x64xf32>, vector<64x256xf32>, vector<8x256xf32> -> vector<8x256xf32>
    %cst_78 = arith.constant dense<0.000000e+00> : vector<8x256xf32>
    %339 = tpu.matmul %307, %5, %cst_78 {dimension_numbers = #tpu.dot_dimension_numbers<[1], [0], [0], [1], [0, 0, 1, 1], [], []>} : vector<8x64xf32>, vector<64x256xf32>, vector<8x256xf32> -> vector<8x256xf32>
    %340 = arith.addf %338, %339 : vector<8x256xf32>
    %341 = arith.addf %340, %8 : vector<8x256xf32>
    %342 = vector.extract_strided_slice %341 {offsets = [0, 0], sizes = [8, 64], strides = [1, 1]} : vector<8x256xf32> to vector<8x64xf32>
    %343 = arith.negf %342 : vector<8x64xf32>
    %344 = math.exp %343 : vector<8x64xf32>
    %cst_79 = arith.constant 1.000000e+00 : f32
    %345 = vector.broadcast %cst_79 : f32 to vector<8x64xf32>
    %346 = arith.addf %345, %344 : vector<8x64xf32>
    %347 = arith.divf %345, %346 : vector<8x64xf32>
    %348 = vector.extract_strided_slice %341 {offsets = [0, 64], sizes = [8, 64], strides = [1, 1]} : vector<8x256xf32> to vector<8x64xf32>
    %349 = arith.negf %348 : vector<8x64xf32>
    %350 = math.exp %349 : vector<8x64xf32>
    %cst_80 = arith.constant 1.000000e+00 : f32
    %351 = vector.broadcast %cst_80 : f32 to vector<8x64xf32>
    %352 = arith.addf %351, %350 : vector<8x64xf32>
    %353 = arith.divf %351, %352 : vector<8x64xf32>
    %354 = vector.extract_strided_slice %341 {offsets = [0, 128], sizes = [8, 64], strides = [1, 1]} : vector<8x256xf32> to vector<8x64xf32>
    %355 = math.tanh %354 : vector<8x64xf32>
    %356 = vector.extract_strided_slice %341 {offsets = [0, 192], sizes = [8, 64], strides = [1, 1]} : vector<8x256xf32> to vector<8x64xf32>
    %357 = arith.negf %356 : vector<8x64xf32>
    %358 = math.exp %357 : vector<8x64xf32>
    %cst_81 = arith.constant 1.000000e+00 : f32
    %359 = vector.broadcast %cst_81 : f32 to vector<8x64xf32>
    %360 = arith.addf %359, %358 : vector<8x64xf32>
    %361 = arith.divf %359, %360 : vector<8x64xf32>
    %362 = arith.mulf %353, %305 : vector<8x64xf32>
    %363 = arith.mulf %347, %355 : vector<8x64xf32>
    %364 = arith.addf %362, %363 : vector<8x64xf32>
    %365 = math.tanh %364 : vector<8x64xf32>
    %366 = arith.mulf %361, %365 : vector<8x64xf32>
    %c6_i32 = arith.constant 6 : i32
    %367 = arith.index_cast %c6_i32 : i32 to index
    %c0_82 = arith.constant 0 : index
    %c0_83 = arith.constant 0 : index
    %368 = vector.load %arg1[%367, %c0_82, %c0_83] : memref<8x8x256xf32, #tpu.memory_space<vmem>>, vector<1x8x256xf32>
    %369 = vector.shape_cast %368 : vector<1x8x256xf32> to vector<8x256xf32>
    %cst_84 = arith.constant dense<0.000000e+00> : vector<8x256xf32>
    %370 = tpu.matmul %337, %3, %cst_84 {dimension_numbers = #tpu.dot_dimension_numbers<[1], [0], [0], [1], [0, 0, 1, 1], [], []>} : vector<8x64xf32>, vector<64x256xf32>, vector<8x256xf32> -> vector<8x256xf32>
    %371 = arith.addf %369, %370 : vector<8x256xf32>
    %372 = vector.extract_strided_slice %371 {offsets = [0, 0], sizes = [8, 64], strides = [1, 1]} : vector<8x256xf32> to vector<8x64xf32>
    %373 = arith.negf %372 : vector<8x64xf32>
    %374 = math.exp %373 : vector<8x64xf32>
    %cst_85 = arith.constant 1.000000e+00 : f32
    %375 = vector.broadcast %cst_85 : f32 to vector<8x64xf32>
    %376 = arith.addf %375, %374 : vector<8x64xf32>
    %377 = arith.divf %375, %376 : vector<8x64xf32>
    %378 = vector.extract_strided_slice %371 {offsets = [0, 64], sizes = [8, 64], strides = [1, 1]} : vector<8x256xf32> to vector<8x64xf32>
    %379 = arith.negf %378 : vector<8x64xf32>
    %380 = math.exp %379 : vector<8x64xf32>
    %cst_86 = arith.constant 1.000000e+00 : f32
    %381 = vector.broadcast %cst_86 : f32 to vector<8x64xf32>
    %382 = arith.addf %381, %380 : vector<8x64xf32>
    %383 = arith.divf %381, %382 : vector<8x64xf32>
    %384 = vector.extract_strided_slice %371 {offsets = [0, 128], sizes = [8, 64], strides = [1, 1]} : vector<8x256xf32> to vector<8x64xf32>
    %385 = math.tanh %384 : vector<8x64xf32>
    %386 = vector.extract_strided_slice %371 {offsets = [0, 192], sizes = [8, 64], strides = [1, 1]} : vector<8x256xf32> to vector<8x64xf32>
    %387 = arith.negf %386 : vector<8x64xf32>
    %388 = math.exp %387 : vector<8x64xf32>
    %cst_87 = arith.constant 1.000000e+00 : f32
    %389 = vector.broadcast %cst_87 : f32 to vector<8x64xf32>
    %390 = arith.addf %389, %388 : vector<8x64xf32>
    %391 = arith.divf %389, %390 : vector<8x64xf32>
    %392 = arith.mulf %383, %335 : vector<8x64xf32>
    %393 = arith.mulf %377, %385 : vector<8x64xf32>
    %394 = arith.addf %392, %393 : vector<8x64xf32>
    %395 = math.tanh %394 : vector<8x64xf32>
    %396 = arith.mulf %391, %395 : vector<8x64xf32>
    %cst_88 = arith.constant dense<0.000000e+00> : vector<8x256xf32>
    %397 = tpu.matmul %396, %4, %cst_88 {dimension_numbers = #tpu.dot_dimension_numbers<[1], [0], [0], [1], [0, 0, 1, 1], [], []>} : vector<8x64xf32>, vector<64x256xf32>, vector<8x256xf32> -> vector<8x256xf32>
    %cst_89 = arith.constant dense<0.000000e+00> : vector<8x256xf32>
    %398 = tpu.matmul %366, %5, %cst_89 {dimension_numbers = #tpu.dot_dimension_numbers<[1], [0], [0], [1], [0, 0, 1, 1], [], []>} : vector<8x64xf32>, vector<64x256xf32>, vector<8x256xf32> -> vector<8x256xf32>
    %399 = arith.addf %397, %398 : vector<8x256xf32>
    %400 = arith.addf %399, %8 : vector<8x256xf32>
    %401 = vector.extract_strided_slice %400 {offsets = [0, 0], sizes = [8, 64], strides = [1, 1]} : vector<8x256xf32> to vector<8x64xf32>
    %402 = arith.negf %401 : vector<8x64xf32>
    %403 = math.exp %402 : vector<8x64xf32>
    %cst_90 = arith.constant 1.000000e+00 : f32
    %404 = vector.broadcast %cst_90 : f32 to vector<8x64xf32>
    %405 = arith.addf %404, %403 : vector<8x64xf32>
    %406 = arith.divf %404, %405 : vector<8x64xf32>
    %407 = vector.extract_strided_slice %400 {offsets = [0, 64], sizes = [8, 64], strides = [1, 1]} : vector<8x256xf32> to vector<8x64xf32>
    %408 = arith.negf %407 : vector<8x64xf32>
    %409 = math.exp %408 : vector<8x64xf32>
    %cst_91 = arith.constant 1.000000e+00 : f32
    %410 = vector.broadcast %cst_91 : f32 to vector<8x64xf32>
    %411 = arith.addf %410, %409 : vector<8x64xf32>
    %412 = arith.divf %410, %411 : vector<8x64xf32>
    %413 = vector.extract_strided_slice %400 {offsets = [0, 128], sizes = [8, 64], strides = [1, 1]} : vector<8x256xf32> to vector<8x64xf32>
    %414 = math.tanh %413 : vector<8x64xf32>
    %415 = vector.extract_strided_slice %400 {offsets = [0, 192], sizes = [8, 64], strides = [1, 1]} : vector<8x256xf32> to vector<8x64xf32>
    %416 = arith.negf %415 : vector<8x64xf32>
    %417 = math.exp %416 : vector<8x64xf32>
    %cst_92 = arith.constant 1.000000e+00 : f32
    %418 = vector.broadcast %cst_92 : f32 to vector<8x64xf32>
    %419 = arith.addf %418, %417 : vector<8x64xf32>
    %420 = arith.divf %418, %419 : vector<8x64xf32>
    %421 = arith.mulf %412, %364 : vector<8x64xf32>
    %422 = arith.mulf %406, %414 : vector<8x64xf32>
    %423 = arith.addf %421, %422 : vector<8x64xf32>
    %424 = math.tanh %423 : vector<8x64xf32>
    %425 = arith.mulf %420, %424 : vector<8x64xf32>
    %c7_i32 = arith.constant 7 : i32
    %426 = arith.index_cast %c7_i32 : i32 to index
    %c0_93 = arith.constant 0 : index
    %c0_94 = arith.constant 0 : index
    %427 = vector.load %arg1[%426, %c0_93, %c0_94] : memref<8x8x256xf32, #tpu.memory_space<vmem>>, vector<1x8x256xf32>
    %428 = vector.shape_cast %427 : vector<1x8x256xf32> to vector<8x256xf32>
    %cst_95 = arith.constant dense<0.000000e+00> : vector<8x256xf32>
    %429 = tpu.matmul %396, %3, %cst_95 {dimension_numbers = #tpu.dot_dimension_numbers<[1], [0], [0], [1], [0, 0, 1, 1], [], []>} : vector<8x64xf32>, vector<64x256xf32>, vector<8x256xf32> -> vector<8x256xf32>
    %430 = arith.addf %428, %429 : vector<8x256xf32>
    %431 = vector.extract_strided_slice %430 {offsets = [0, 0], sizes = [8, 64], strides = [1, 1]} : vector<8x256xf32> to vector<8x64xf32>
    %432 = arith.negf %431 : vector<8x64xf32>
    %433 = math.exp %432 : vector<8x64xf32>
    %cst_96 = arith.constant 1.000000e+00 : f32
    %434 = vector.broadcast %cst_96 : f32 to vector<8x64xf32>
    %435 = arith.addf %434, %433 : vector<8x64xf32>
    %436 = arith.divf %434, %435 : vector<8x64xf32>
    %437 = vector.extract_strided_slice %430 {offsets = [0, 64], sizes = [8, 64], strides = [1, 1]} : vector<8x256xf32> to vector<8x64xf32>
    %438 = arith.negf %437 : vector<8x64xf32>
    %439 = math.exp %438 : vector<8x64xf32>
    %cst_97 = arith.constant 1.000000e+00 : f32
    %440 = vector.broadcast %cst_97 : f32 to vector<8x64xf32>
    %441 = arith.addf %440, %439 : vector<8x64xf32>
    %442 = arith.divf %440, %441 : vector<8x64xf32>
    %443 = vector.extract_strided_slice %430 {offsets = [0, 128], sizes = [8, 64], strides = [1, 1]} : vector<8x256xf32> to vector<8x64xf32>
    %444 = math.tanh %443 : vector<8x64xf32>
    %445 = vector.extract_strided_slice %430 {offsets = [0, 192], sizes = [8, 64], strides = [1, 1]} : vector<8x256xf32> to vector<8x64xf32>
    %446 = arith.negf %445 : vector<8x64xf32>
    %447 = math.exp %446 : vector<8x64xf32>
    %cst_98 = arith.constant 1.000000e+00 : f32
    %448 = vector.broadcast %cst_98 : f32 to vector<8x64xf32>
    %449 = arith.addf %448, %447 : vector<8x64xf32>
    %450 = arith.divf %448, %449 : vector<8x64xf32>
    %451 = arith.mulf %442, %394 : vector<8x64xf32>
    %452 = arith.mulf %436, %444 : vector<8x64xf32>
    %453 = arith.addf %451, %452 : vector<8x64xf32>
    %454 = math.tanh %453 : vector<8x64xf32>
    %455 = arith.mulf %450, %454 : vector<8x64xf32>
    %cst_99 = arith.constant dense<0.000000e+00> : vector<8x256xf32>
    %456 = tpu.matmul %455, %4, %cst_99 {dimension_numbers = #tpu.dot_dimension_numbers<[1], [0], [0], [1], [0, 0, 1, 1], [], []>} : vector<8x64xf32>, vector<64x256xf32>, vector<8x256xf32> -> vector<8x256xf32>
    %cst_100 = arith.constant dense<0.000000e+00> : vector<8x256xf32>
    %457 = tpu.matmul %425, %5, %cst_100 {dimension_numbers = #tpu.dot_dimension_numbers<[1], [0], [0], [1], [0, 0, 1, 1], [], []>} : vector<8x64xf32>, vector<64x256xf32>, vector<8x256xf32> -> vector<8x256xf32>
    %458 = arith.addf %456, %457 : vector<8x256xf32>
    %459 = arith.addf %458, %8 : vector<8x256xf32>
    %460 = vector.extract_strided_slice %459 {offsets = [0, 0], sizes = [8, 64], strides = [1, 1]} : vector<8x256xf32> to vector<8x64xf32>
    %461 = arith.negf %460 : vector<8x64xf32>
    %462 = math.exp %461 : vector<8x64xf32>
    %cst_101 = arith.constant 1.000000e+00 : f32
    %463 = vector.broadcast %cst_101 : f32 to vector<8x64xf32>
    %464 = arith.addf %463, %462 : vector<8x64xf32>
    %465 = arith.divf %463, %464 : vector<8x64xf32>
    %466 = vector.extract_strided_slice %459 {offsets = [0, 64], sizes = [8, 64], strides = [1, 1]} : vector<8x256xf32> to vector<8x64xf32>
    %467 = arith.negf %466 : vector<8x64xf32>
    %468 = math.exp %467 : vector<8x64xf32>
    %cst_102 = arith.constant 1.000000e+00 : f32
    %469 = vector.broadcast %cst_102 : f32 to vector<8x64xf32>
    %470 = arith.addf %469, %468 : vector<8x64xf32>
    %471 = arith.divf %469, %470 : vector<8x64xf32>
    %472 = vector.extract_strided_slice %459 {offsets = [0, 128], sizes = [8, 64], strides = [1, 1]} : vector<8x256xf32> to vector<8x64xf32>
    %473 = math.tanh %472 : vector<8x64xf32>
    %474 = vector.extract_strided_slice %459 {offsets = [0, 192], sizes = [8, 64], strides = [1, 1]} : vector<8x256xf32> to vector<8x64xf32>
    %475 = arith.negf %474 : vector<8x64xf32>
    %476 = math.exp %475 : vector<8x64xf32>
    %cst_103 = arith.constant 1.000000e+00 : f32
    %477 = vector.broadcast %cst_103 : f32 to vector<8x64xf32>
    %478 = arith.addf %477, %476 : vector<8x64xf32>
    %479 = arith.divf %477, %478 : vector<8x64xf32>
    %480 = arith.mulf %471, %423 : vector<8x64xf32>
    %481 = arith.mulf %465, %473 : vector<8x64xf32>
    %482 = arith.addf %480, %481 : vector<8x64xf32>
    %483 = math.tanh %482 : vector<8x64xf32>
    %484 = arith.mulf %479, %483 : vector<8x64xf32>
    %c8_i32 = arith.constant 8 : i32
    %c0_104 = arith.constant 0 : index
    %c0_105 = arith.constant 0 : index
    %485 = vector.load %arg9[%c0_104, %c0_105] : memref<8x64xf32, #tpu.memory_space<vmem>>, vector<8x64xf32>
    tpu.vector_store %arg9[%c0_104, %c0_105], %455 {strides = array<i32>} : memref<8x64xf32, #tpu.memory_space<vmem>>, vector<8x64xf32>,
    %c0_106 = arith.constant 0 : index
    %c0_107 = arith.constant 0 : index
    %486 = vector.load %arg10[%c0_106, %c0_107] : memref<8x64xf32, #tpu.memory_space<vmem>>, vector<8x64xf32>
    tpu.vector_store %arg10[%c0_106, %c0_107], %453 {strides = array<i32>} : memref<8x64xf32, #tpu.memory_space<vmem>>, vector<8x64xf32>,
    %c0_108 = arith.constant 0 : index
    %c0_109 = arith.constant 0 : index
    %487 = vector.load %arg11[%c0_108, %c0_109] : memref<8x64xf32, #tpu.memory_space<vmem>>, vector<8x64xf32>
    tpu.vector_store %arg11[%c0_108, %c0_109], %484 {strides = array<i32>} : memref<8x64xf32, #tpu.memory_space<vmem>>, vector<8x64xf32>,
    %c0_110 = arith.constant 0 : index
    %c0_111 = arith.constant 0 : index
    %488 = vector.load %arg12[%c0_110, %c0_111] : memref<8x64xf32, #tpu.memory_space<vmem>>, vector<8x64xf32>
    tpu.vector_store %arg12[%c0_110, %c0_111], %482 {strides = array<i32>} : memref<8x64xf32, #tpu.memory_space<vmem>>, vector<8x64xf32>,
    %c0_i32_112 = arith.constant 0 : i32
    %489 = arith.cmpi eq, %arg0, %c0_i32_112 : i32
    %490 = arith.extui %489 : i1 to i32
    %c0_i32_113 = arith.constant 0 : i32
    %491 = arith.cmpi ne, %490, %c0_i32_113 : i32
    scf.if %491 {
      %c0_114 = arith.constant 0 : index
      %c0_115 = arith.constant 0 : index
      %492 = vector.load %arg6[%c0_114, %c0_115] : memref<64x128xf32, #tpu.memory_space<vmem>>, vector<64x128xf32>
      %cst_116 = arith.constant dense<0.000000e+00> : vector<8x128xf32>
      %493 = tpu.matmul %484, %492, %cst_116 {dimension_numbers = #tpu.dot_dimension_numbers<[1], [0], [0], [1], [0, 0, 1, 1], [], []>} : vector<8x64xf32>, vector<64x128xf32>, vector<8x128xf32> -> vector<8x128xf32>
      %c0_117 = arith.constant 0 : index
      %c0_118 = arith.constant 0 : index
      %494 = vector.load %arg7[%c0_117, %c0_118] : memref<1x128xf32, #tpu.memory_space<vmem>>, vector<1x128xf32>
      %495 = vector.broadcast %494 : vector<1x128xf32> to vector<8x128xf32>
      %496 = arith.addf %493, %495 : vector<8x128xf32>
      %cst_119 = arith.constant dense<0xFF800000> : vector<8xf32>
      %497 = vector.multi_reduction <maximumf>, %496, %cst_119 [1] : vector<8x128xf32> to vector<8xf32>
      %498 = vector.shape_cast %497 : vector<8xf32> to vector<8x1xf32>
      %499 = vector.broadcast %498 : vector<8x1xf32> to vector<8x128xf32>
      %500 = arith.subf %496, %499 : vector<8x128xf32>
      %501 = math.exp %500 : vector<8x128xf32>
      %cst_120 = arith.constant dense<0.000000e+00> : vector<8xf32>
      %502 = vector.multi_reduction <add>, %501, %cst_120 [1] : vector<8x128xf32> to vector<8xf32>
      %503 = vector.shape_cast %502 : vector<8xf32> to vector<8x1xf32>
      %504 = math.log %503 : vector<8x1xf32>
      %505 = vector.broadcast %504 : vector<8x1xf32> to vector<8x128xf32>
      %506 = arith.subf %500, %505 : vector<8x128xf32>
      %c0_121 = arith.constant 0 : index
      %c0_122 = arith.constant 0 : index
      %507 = vector.load %arg8[%c0_121, %c0_122] : memref<8x128xf32, #tpu.memory_space<vmem>>, vector<8x128xf32>
      tpu.vector_store %arg8[%c0_121, %c0_122], %506 {strides = array<i32>} : memref<8x128xf32, #tpu.memory_space<vmem>>, vector<8x128xf32>,
    } else {
    }
    return
  }
  func.func @transform_0(%arg0: i32) -> (i32, i32, i32) {
    %c0_i32 = arith.constant 0 : i32
    %c0_i32_0 = arith.constant 0 : i32
    %c0_i32_1 = arith.constant 0 : i32
    return %arg0, %c0_i32, %c0_i32_0 : i32, i32, i32
  }
  func.func @transform_1(%arg0: i32) -> (i32, i32) {
    %c0_i32 = arith.constant 0 : i32
    %c0_i32_0 = arith.constant 0 : i32
    %c0_i32_1 = arith.constant 0 : i32
    return %c0_i32, %c0_i32_0 : i32, i32
  }
  func.func @transform_2(%arg0: i32) -> (i32, i32) {
    %c0_i32 = arith.constant 0 : i32
    %c0_i32_0 = arith.constant 0 : i32
    %c0_i32_1 = arith.constant 0 : i32
    return %c0_i32, %c0_i32_0 : i32, i32
  }
  func.func @transform_3(%arg0: i32) -> (i32, i32) {
    %c0_i32 = arith.constant 0 : i32
    %c0_i32_0 = arith.constant 0 : i32
    %c0_i32_1 = arith.constant 0 : i32
    return %c0_i32, %c0_i32_0 : i32, i32
  }
  func.func @transform_4(%arg0: i32) -> (i32, i32) {
    %c0_i32 = arith.constant 0 : i32
    %c0_i32_0 = arith.constant 0 : i32
    %c0_i32_1 = arith.constant 0 : i32
    return %c0_i32, %c0_i32_0 : i32, i32
  }
  func.func @transform_5(%arg0: i32) -> (i32, i32) {
    %c0_i32 = arith.constant 0 : i32
    %c0_i32_0 = arith.constant 0 : i32
    %c0_i32_1 = arith.constant 0 : i32
    return %c0_i32, %c0_i32_0 : i32, i32
  }
  func.func @transform_6(%arg0: i32) -> (i32, i32) {
    %c0_i32 = arith.constant 0 : i32
    %c0_i32_0 = arith.constant 0 : i32
    %c0_i32_1 = arith.constant 0 : i32
    return %c0_i32, %c0_i32_0 : i32, i32
  }
  func.func @transform_7(%arg0: i32) -> (i32, i32) {
    %c0_i32 = arith.constant 0 : i32
    %c0_i32_0 = arith.constant 0 : i32
    %c0_i32_1 = arith.constant 0 : i32
    return %c0_i32, %c0_i32_0 : i32, i32
  }
}

</mosaic_0001>

<llo_original>
// kernel: audio_lstm_forward.1
$region0: #{audio_lstm_forward.1}
  #allocation0 [shape = 'u32[]', space=smem, size = 0x4, offset = 0x4, fixed_abs, tag = 'smem constant byte address 0x4 - core index']
  #allocation1 [shape = 'u32[72,128]{1,0:T(1,128)}', space=vmem, size = 0x9000, scoped, tag = 'internal scratch']
  #allocation2 [shape = 'f32[8,64]{1,0:T(8,128)}', space=vmem, size = 0x1000, scoped, tag = 'scratch operand']
  #allocation3 [shape = 'f32[8,64]{1,0:T(8,128)}', space=vmem, size = 0x1000, scoped, tag = 'scratch operand']
  #allocation4 [shape = 'f32[8,64]{1,0:T(8,128)}', space=vmem, size = 0x1000, scoped, tag = 'scratch operand']
  #allocation5 [shape = 'f32[8,64]{1,0:T(8,128)}', space=vmem, size = 0x1000, scoped, tag = 'scratch operand']
  %s0 = inlined_call_operand.vmem [shape: f32[8,8,256], index: 0, kind: input, shape index: {}]
  %s1 = inlined_call_operand.vmem [shape: f32[64,256], index: 1, kind: input, shape index: {}]
  %s2 = inlined_call_operand.vmem [shape: f32[64,256], index: 2, kind: input, shape index: {}]
  %s3 = inlined_call_operand.vmem [shape: f32[64,256], index: 3, kind: input, shape index: {}]
  %s4 = inlined_call_operand.vmem [shape: f32[1,256], index: 4, kind: input, shape index: {}]
  %s5 = inlined_call_operand.vmem [shape: f32[64,128], index: 5, kind: input, shape index: {}]
  %s6 = inlined_call_operand.vmem [shape: f32[1,128], index: 6, kind: input, shape index: {}]
  %s7 = inlined_call_operand.vmem [shape: f32[8,128], index: 7, kind: output, shape index: {}]
  %s8 = sld [smem:[#allocation0]]
  $region46: #{audio_lstm_forward.1} parent=0
    _
  %s10 = ssub.s32 1, %s8
  %s11 = scalar_select 0, %s10, %s8
  // Predicated region
  $region2: #{audio_lstm_forward.1} parent=0 // pred_check
    _
  $region3: #{audio_lstm_forward.1} parent=0 // pred_check_branch
    %13 = sbr.rel (0) target = $region5
  $region4: #{audio_lstm_forward.1} parent=0 // pred_region
    _
  $region5: #{audio_lstm_forward.1} parent=0 // pred_fallthru
    _
  // Predicated region
  $region6: #{audio_lstm_forward.1} parent=0 // pred_check
    _
  $region7: #{audio_lstm_forward.1} parent=0 // pred_check_branch
    %15 = sbr.rel (0) target = $region9
  $region8: #{audio_lstm_forward.1} parent=0 // pred_region
    _
  $region9: #{audio_lstm_forward.1} parent=0 // pred_fallthru
    _
  // Predicated region
  $region10: #{audio_lstm_forward.1} parent=0 // pred_check
    _
  $region11: #{audio_lstm_forward.1} parent=0 // pred_check_branch
    %17 = sbr.rel (0) target = $region13
  $region12: #{audio_lstm_forward.1} parent=0 // pred_region
    _
  $region13: #{audio_lstm_forward.1} parent=0 // pred_fallthru
    _
  // Predicated region
  $region14: #{audio_lstm_forward.1} parent=0 // pred_check
    _
  $region15: #{audio_lstm_forward.1} parent=0 // pred_check_branch
    %19 = sbr.rel (0) target = $region17
  $region16: #{audio_lstm_forward.1} parent=0 // pred_region
    _
  $region17: #{audio_lstm_forward.1} parent=0 // pred_fallthru
    _
  // Predicated region
  $region18: #{audio_lstm_forward.1} parent=0 // pred_check
    _
  $region19: #{audio_lstm_forward.1} parent=0 // pred_check_branch
    %21 = sbr.rel (0) target = $region21
  $region20: #{audio_lstm_forward.1} parent=0 // pred_region
    _
  $region21: #{audio_lstm_forward.1} parent=0 // pred_fallthru
    _
  // Predicated region
  $region22: #{audio_lstm_forward.1} parent=0 // pred_check
    _
  $region23: #{audio_lstm_forward.1} parent=0 // pred_check_branch
    %23 = sbr.rel (0) target = $region25
  $region24: #{audio_lstm_forward.1} parent=0 // pred_region
    _
  $region25: #{audio_lstm_forward.1} parent=0 // pred_fallthru
    _
  // Predicated region
  $region26: #{audio_lstm_forward.1} parent=0 // pred_check
    _
  $region27: #{audio_lstm_forward.1} parent=0 // pred_check_branch
    %25 = sbr.rel (0) target = $region29
  $region28: #{audio_lstm_forward.1} parent=0 // pred_region
    _
  $region29: #{audio_lstm_forward.1} parent=0 // pred_fallthru
    _
  %p26 = scmp.eq.s32.totalorder 0, 0
  // Predicated region
  $region30: #{audio_lstm_forward.1} parent=0 // pred_check
    %p27 = pneg %p26
  $region31: #{audio_lstm_forward.1} parent=0 // pred_check_branch
    %29 = sbr.rel (%p27) target = $region33
  $region32: #{audio_lstm_forward.1} parent=0 // pred_region
    %vm30 = vcmask 523264
    %31 = vst.msk [vmem:[#allocation2] sm:$0xff] %vm30, 0.0
    %32 = vst.msk [vmem:[#allocation3] sm:$0xff] %vm30, 0.0
    %33 = vst.msk [vmem:[#allocation4] sm:$0xff] %vm30, 0.0
    %34 = vst.msk [vmem:[#allocation5] sm:$0xff] %vm30, 0.0
  $region33: #{audio_lstm_forward.1} parent=0 // pred_fallthru
    _
  %v35 = vld [vmem:[%s1] sm:$0xff]
  %v36 = vld [vmem:[%s1 + $0x8] sm:$0xff]
  %v37 = vld [vmem:[%s1 + $0x10] sm:$0xff]
  %v38 = vld [vmem:[%s1 + $0x18] sm:$0xff]
  %v39 = vld [vmem:[%s1 + $0x20] sm:$0xff]
  %v40 = vld [vmem:[%s1 + $0x28] sm:$0xff]
  %v41 = vld [vmem:[%s1 + $0x30] sm:$0xff]
  %v42 = vld [vmem:[%s1 + $0x38] sm:$0xff]
  %v43 = vld [vmem:[%s1 + $0x40] sm:$0xff]
  %v44 = vld [vmem:[%s1 + $0x48] sm:$0xff]
  %v45 = vld [vmem:[%s1 + $0x50] sm:$0xff]
  %v46 = vld [vmem:[%s1 + $0x58] sm:$0xff]
  %v47 = vld [vmem:[%s1 + $0x60] sm:$0xff]
  %v48 = vld [vmem:[%s1 + $0x68] sm:$0xff]
  %v49 = vld [vmem:[%s1 + $0x70] sm:$0xff]
  %v50 = vld [vmem:[%s1 + $0x78] sm:$0xff]
  %v51 = vld [vmem:[%s2] sm:$0xff]
  %v52 = vld [vmem:[%s2 + $0x8] sm:$0xff]
  %v53 = vld [vmem:[%s2 + $0x10] sm:$0xff]
  %v54 = vld [vmem:[%s2 + $0x18] sm:$0xff]
  %v55 = vld [vmem:[%s2 + $0x20] sm:$0xff]
  %v56 = vld [vmem:[%s2 + $0x28] sm:$0xff]
  %v57 = vld [vmem:[%s2 + $0x30] sm:$0xff]
  %v58 = vld [vmem:[%s2 + $0x38] sm:$0xff]
  %v59 = vld [vmem:[%s2 + $0x40] sm:$0xff]
  %v60 = vld [vmem:[%s2 + $0x48] sm:$0xff]
  %v61 = vld [vmem:[%s2 + $0x50] sm:$0xff]
  %v62 = vld [vmem:[%s2 + $0x58] sm:$0xff]
  %v63 = vld [vmem:[%s2 + $0x60] sm:$0xff]
  %v64 = vld [vmem:[%s2 + $0x68] sm:$0xff]
  %v65 = vld [vmem:[%s2 + $0x70] sm:$0xff]
  %v66 = vld [vmem:[%s2 + $0x78] sm:$0xff]
  %v67 = vld [vmem:[%s3] sm:$0xff]
  %v68 = vld [vmem:[%s3 + $0x8] sm:$0xff]
  %v69 = vld [vmem:[%s3 + $0x10] sm:$0xff]
  %v70 = vld [vmem:[%s3 + $0x18] sm:$0xff]
  %v71 = vld [vmem:[%s3 + $0x20] sm:$0xff]
  %v72 = vld [vmem:[%s3 + $0x28] sm:$0xff]
  %v73 = vld [vmem:[%s3 + $0x30] sm:$0xff]
  %v74 = vld [vmem:[%s3 + $0x38] sm:$0xff]
  %v75 = vld [vmem:[%s3 + $0x40] sm:$0xff]
  %v76 = vld [vmem:[%s3 + $0x48] sm:$0xff]
  %v77 = vld [vmem:[%s3 + $0x50] sm:$0xff]
  %v78 = vld [vmem:[%s3 + $0x58] sm:$0xff]
  %v79 = vld [vmem:[%s3 + $0x60] sm:$0xff]
  %v80 = vld [vmem:[%s3 + $0x68] sm:$0xff]
  %v81 = vld [vmem:[%s3 + $0x70] sm:$0xff]
  %v82 = vld [vmem:[%s3 + $0x78] sm:$0xff]
  %v83 = vld [vmem:[%s4] sm:$0x3]
  %v85 = vperm.slane %v83, 0
  %v86 = vperm.slane %v83, 1
  %v89 = vld [vmem:[#allocation2] sm:$0xff]
  %v90 = vld [vmem:[#allocation3] sm:$0xff]
  %v91 = vld [vmem:[#allocation4] sm:$0xff]
  %v92 = vld [vmem:[#allocation5] sm:$0xff]
  %v93 = vld [vmem:[%s0] sm:$0xff]
  %v94 = vld [vmem:[%s0 + $0x8] sm:$0xff]
  %vm95 = vcmask 523264
  %v97 = vsel %vm95, %v89, 0
  %99 = vmatpush.msra.mxu0 0.0
  %100 = vmatpush.msra.mxu0 0.0
  %101 = vmatpush.msra.mxu0 0.0
  %102 = vmatpush.msra.mxu0 0.0
  %103 = vmatpush.msra.mxu0 0.0
  %104 = vmatpush.msra.mxu0 0.0
  %105 = vmatpush.msra.mxu0 0.0
  %106 = vmatpush.msra.mxu0 0.0
  %107 = vmatpush.msra.mxu0 %v49
  %108 = vmatpush.msra.mxu0 %v47
  %109 = vmatpush.msra.mxu0 %v45
  %110 = vmatpush.msra.mxu0 %v43
  %111 = vmatpush.msra.mxu0 %v41
  %112 = vmatpush.msra.mxu0 %v39
  %113 = vmatpush.msra.mxu0 %v37
  %114 = vmatpush.msra.mxu0 %v35
  %115 = vmatmul.f32.gmra.mxu0 %v97
  %v116 = vpop.f32.mrf.mxu0
  %v117 = vadd.f32 0.0, %v116
  %118 = vdwg.mxu0
  %119 = vmatpush.msra.mxu0 0.0
  %120 = vmatpush.msra.mxu0 0.0
  %121 = vmatpush.msra.mxu0 0.0
  %122 = vmatpush.msra.mxu0 0.0
  %123 = vmatpush.msra.mxu0 0.0
  %124 = vmatpush.msra.mxu0 0.0
  %125 = vmatpush.msra.mxu0 0.0
  %126 = vmatpush.msra.mxu0 0.0
  %127 = vmatpush.msra.mxu0 %v50
  %128 = vmatpush.msra.mxu0 %v48
  %129 = vmatpush.msra.mxu0 %v46
  %130 = vmatpush.msra.mxu0 %v44
  %131 = vmatpush.msra.mxu0 %v42
  %132 = vmatpush.msra.mxu0 %v40
  %133 = vmatpush.msra.mxu0 %v38
  %134 = vmatpush.msra.mxu0 %v36
  %135 = vmatmul.f32.gmra.mxu0 %v97
  %v136 = vpop.f32.mrf.mxu0
  %v137 = vadd.f32 0.0, %v136
  %138 = vdwg.mxu0
  %v139 = vadd.f32 %v93, %v117
  %v140 = vadd.f32 %v94, %v137
  %v141 = vxor.u32 %v139, 2147483648
  %v142 = vmul.f32 %v141, 1.442695
  %v143 = vpow.pop %v142
  %v144 = vadd.f32 %v143, 1.0
  %v145 = vrcp.pop %v144
  %v146 = vmul.f32 %v144, %v145
  %v147 = vsub.f32 1.0, %v146
  %v148 = vmul.f32 %v145, %v147
  %v149 = vadd.f32 %v145, %v148
  %vm150 = vweird.f32 %v144
  %vm151 = vweird.f32 %v145
  %vm152 = vmor %vm150, %vm151
  %v153 = vsel %vm152, %v145, %v149
  %v154 = vand.u32 2147483647, %v144
  %vm155 = vcmp.eq.f32.partialorder %v154, 8.507059e+37
  %v156 = vand.u32 %v144, 2147483648
  %v157 = vor.u32 1.1754944e-38, %v156
  %v158 = vsel %vm155, %v157, %v153
  %v159 = vmul.f32 1.0, %v158
  %v160 = vtanh.pop %v140
  %v161 = vxor.u32 %v140, 2147483648
  %v162 = vmul.f32 %v161, 1.442695
  %v163 = vpow.pop %v162
  %v164 = vadd.f32 %v163, 1.0
  %v165 = vrcp.pop %v164
  %v166 = vmul.f32 %v164, %v165
  %v167 = vsub.f32 1.0, %v166
  %v168 = vmul.f32 %v165, %v167
  %v169 = vadd.f32 %v165, %v168
  %vm170 = vweird.f32 %v164
  %vm171 = vweird.f32 %v165
  %vm172 = vmor %vm170, %vm171
  %v173 = vsel %vm172, %v165, %v169
  %v174 = vand.u32 2147483647, %v164
  %vm175 = vcmp.eq.f32.partialorder %v174, 8.507059e+37
  %v176 = vand.u32 %v164, 2147483648
  %v177 = vor.u32 1.1754944e-38, %v176
  %v178 = vsel %vm175, %v177, %v173
  %v179 = vmul.f32 1.0, %v178
  %181 = vrot.lane.b32.xlu0 %v90, 64
  %v182 = vpop.permute.xlu0 %181
  %v184 = vmul.f32 %v159, %v182
  %v185 = vmul.f32 %v159, %v160
  %187 = vrot.lane.b32.xlu0 %v185, 64
  %v188 = vpop.permute.xlu0 %187
  %v190 = vadd.f32 %v184, %v188
  %v191 = vtanh.pop %v190
  %v192 = vmul.f32 %v179, %v191
  %v194 = vsel %vm95, %v91, 0
  %196 = vmatpush.msra.mxu0 0.0
  %197 = vmatpush.msra.mxu0 0.0
  %198 = vmatpush.msra.mxu0 0.0
  %199 = vmatpush.msra.mxu0 0.0
  %200 = vmatpush.msra.mxu0 0.0
  %201 = vmatpush.msra.mxu0 0.0
  %202 = vmatpush.msra.mxu0 0.0
  %203 = vmatpush.msra.mxu0 0.0
  %204 = vmatpush.msra.mxu0 %v81
  %205 = vmatpush.msra.mxu0 %v79
  %206 = vmatpush.msra.mxu0 %v77
  %207 = vmatpush.msra.mxu0 %v75
  %208 = vmatpush.msra.mxu0 %v73
  %209 = vmatpush.msra.mxu0 %v71
  %210 = vmatpush.msra.mxu0 %v69
  %211 = vmatpush.msra.mxu0 %v67
  %212 = vmatmul.f32.gmra.mxu0 %v194
  %v213 = vpop.f32.mrf.mxu0
  %v214 = vadd.f32 0.0, %v213
  %215 = vdwg.mxu0
  %216 = vmatpush.msra.mxu0 0.0
  %217 = vmatpush.msra.mxu0 0.0
  %218 = vmatpush.msra.mxu0 0.0
  %219 = vmatpush.msra.mxu0 0.0
  %220 = vmatpush.msra.mxu0 0.0
  %221 = vmatpush.msra.mxu0 0.0
  %222 = vmatpush.msra.mxu0 0.0
  %223 = vmatpush.msra.mxu0 0.0
  %224 = vmatpush.msra.mxu0 %v82
  %225 = vmatpush.msra.mxu0 %v80
  %226 = vmatpush.msra.mxu0 %v78
  %227 = vmatpush.msra.mxu0 %v76
  %228 = vmatpush.msra.mxu0 %v74
  %229 = vmatpush.msra.mxu0 %v72
  %230 = vmatpush.msra.mxu0 %v70
  %231 = vmatpush.msra.mxu0 %v68
  %232 = vmatmul.f32.gmra.mxu0 %v194
  %v233 = vpop.f32.mrf.mxu0
  %v234 = vadd.f32 0.0, %v233
  %235 = vdwg.mxu0
  %237 = vrot.lane.b32.xlu0 %v192, 64
  %v238 = vpop.permute.xlu0 %237
  %v239 = vsel %vm95, %v238, 0
  %241 = vmatpush.msra.mxu0 0.0
  %242 = vmatpush.msra.mxu0 0.0
  %243 = vmatpush.msra.mxu0 0.0
  %244 = vmatpush.msra.mxu0 0.0
  %245 = vmatpush.msra.mxu0 0.0
  %246 = vmatpush.msra.mxu0 0.0
  %247 = vmatpush.msra.mxu0 0.0
  %248 = vmatpush.msra.mxu0 0.0
  %249 = vmatpush.msra.mxu0 %v65
  %250 = vmatpush.msra.mxu0 %v63
  %251 = vmatpush.msra.mxu0 %v61
  %252 = vmatpush.msra.mxu0 %v59
  %253 = vmatpush.msra.mxu0 %v57
  %254 = vmatpush.msra.mxu0 %v55
  %255 = vmatpush.msra.mxu0 %v53
  %256 = vmatpush.msra.mxu0 %v51
  %257 = vmatmul.f32.gmra.mxu0 %v239
  %v258 = vpop.f32.mrf.mxu0
  %v259 = vadd.f32 %v214, %v258
  %260 = vdwg.mxu0
  %261 = vmatpush.msra.mxu0 0.0
  %262 = vmatpush.msra.mxu0 0.0
  %263 = vmatpush.msra.mxu0 0.0
  %264 = vmatpush.msra.mxu0 0.0
  %265 = vmatpush.msra.mxu0 0.0
  %266 = vmatpush.msra.mxu0 0.0
  %267 = vmatpush.msra.mxu0 0.0
  %268 = vmatpush.msra.mxu0 0.0
  %269 = vmatpush.msra.mxu0 %v66
  %270 = vmatpush.msra.mxu0 %v64
  %271 = vmatpush.msra.mxu0 %v62
  %272 = vmatpush.msra.mxu0 %v60
  %273 = vmatpush.msra.mxu0 %v58
  %274 = vmatpush.msra.mxu0 %v56
  %275 = vmatpush.msra.mxu0 %v54
  %276 = vmatpush.msra.mxu0 %v52
  %277 = vmatmul.f32.gmra.mxu0 %v239
  %v278 = vpop.f32.mrf.mxu0
  %v279 = vadd.f32 %v234, %v278
  %280 = vdwg.mxu0
  %v281 = vadd.f32 %v259, %v85
  %v282 = vadd.f32 %v279, %v86
  %v283 = vxor.u32 %v281, 2147483648
  %v284 = vmul.f32 %v283, 1.442695
  %v285 = vpow.pop %v284
  %v286 = vadd.f32 %v285, 1.0
  %v287 = vrcp.pop %v286
  %v288 = vmul.f32 %v286, %v287
  %v289 = vsub.f32 1.0, %v288
  %v290 = vmul.f32 %v287, %v289
  %v291 = vadd.f32 %v287, %v290
  %vm292 = vweird.f32 %v286
  %vm293 = vweird.f32 %v287
  %vm294 = vmor %vm292, %vm293
  %v295 = vsel %vm294, %v287, %v291
  %v296 = vand.u32 2147483647, %v286
  %vm297 = vcmp.eq.f32.partialorder %v296, 8.507059e+37
  %v298 = vand.u32 %v286, 2147483648
  %v299 = vor.u32 1.1754944e-38, %v298
  %v300 = vsel %vm297, %v299, %v295
  %v301 = vmul.f32 1.0, %v300
  %v302 = vtanh.pop %v282
  %v303 = vxor.u32 %v282, 2147483648
  %v304 = vmul.f32 %v303, 1.442695
  %v305 = vpow.pop %v304
  %v306 = vadd.f32 %v305, 1.0
  %v307 = vrcp.pop %v306
  %v308 = vmul.f32 %v306, %v307
  %v309 = vsub.f32 1.0, %v308
  %v310 = vmul.f32 %v307, %v309
  %v311 = vadd.f32 %v307, %v310
  %vm312 = vweird.f32 %v306
  %vm313 = vweird.f32 %v307
  %vm314 = vmor %vm312, %vm313
  %v315 = vsel %vm314, %v307, %v311
  %v316 = vand.u32 2147483647, %v306
  %vm317 = vcmp.eq.f32.partialorder %v316, 8.507059e+37
  %v318 = vand.u32 %v306, 2147483648
  %v319 = vor.u32 1.1754944e-38, %v318
  %v320 = vsel %vm317, %v319, %v315
  %v321 = vmul.f32 1.0, %v320
  %323 = vrot.lane.b32.xlu0 %v92, 64
  %v324 = vpop.permute.xlu0 %323
  %v326 = vmul.f32 %v301, %v324
  %v327 = vmul.f32 %v301, %v302
  %329 = vrot.lane.b32.xlu0 %v327, 64
  %v330 = vpop.permute.xlu0 %329
  %v332 = vadd.f32 %v326, %v330
  %v333 = vtanh.pop %v332
  %v334 = vmul.f32 %v321, %v333
  %s335 = scalar_lea.vmem %s0, 16
  %v336 = vld [vmem:[%s335] sm:$0xff]
  %v337 = vld [vmem:[%s335 + $0x8] sm:$0xff]
  %338 = vmatpush.msra.mxu0 0.0
  %339 = vmatpush.msra.mxu0 0.0
  %340 = vmatpush.msra.mxu0 0.0
  %341 = vmatpush.msra.mxu0 0.0
  %342 = vmatpush.msra.mxu0 0.0
  %343 = vmatpush.msra.mxu0 0.0
  %344 = vmatpush.msra.mxu0 0.0
  %345 = vmatpush.msra.mxu0 0.0
  %346 = vmatpush.msra.mxu0 %v49
  %347 = vmatpush.msra.mxu0 %v47
  %348 = vmatpush.msra.mxu0 %v45
  %349 = vmatpush.msra.mxu0 %v43
  %350 = vmatpush.msra.mxu0 %v41
  %351 = vmatpush.msra.mxu0 %v39
  %352 = vmatpush.msra.mxu0 %v37
  %353 = vmatpush.msra.mxu0 %v35
  %354 = vmatmul.f32.gmra.mxu0 %v239
  %v355 = vpop.f32.mrf.mxu0
  %v356 = vadd.f32 0.0, %v355
  %357 = vdwg.mxu0
  %358 = vmatpush.msra.mxu0 0.0
  %359 = vmatpush.msra.mxu0 0.0
  %360 = vmatpush.msra.mxu0 0.0
  %361 = vmatpush.msra.mxu0 0.0
  %362 = vmatpush.msra.mxu0 0.0
  %363 = vmatpush.msra.mxu0 0.0
  %364 = vmatpush.msra.mxu0 0.0
  %365 = vmatpush.msra.mxu0 0.0
  %366 = vmatpush.msra.mxu0 %v50
  %367 = vmatpush.msra.mxu0 %v48
  %368 = vmatpush.msra.mxu0 %v46
  %369 = vmatpush.msra.mxu0 %v44
  %370 = vmatpush.msra.mxu0 %v42
  %371 = vmatpush.msra.mxu0 %v40
  %372 = vmatpush.msra.mxu0 %v38
  %373 = vmatpush.msra.mxu0 %v36
  %374 = vmatmul.f32.gmra.mxu0 %v239
  %v375 = vpop.f32.mrf.mxu0
  %v376 = vadd.f32 0.0, %v375
  %377 = vdwg.mxu0
  %v378 = vadd.f32 %v336, %v356
  %v379 = vadd.f32 %v337, %v376
  %v380 = vxor.u32 %v378, 2147483648
  %v381 = vmul.f32 %v380, 1.442695
  %v382 = vpow.pop %v381
  %v383 = vadd.f32 %v382, 1.0
  %v384 = vrcp.pop %v383
  %v385 = vmul.f32 %v383, %v384
  %v386 = vsub.f32 1.0, %v385
  %v387 = vmul.f32 %v384, %v386
  %v388 = vadd.f32 %v384, %v387
  %vm389 = vweird.f32 %v383
  %vm390 = vweird.f32 %v384
  %vm391 = vmor %vm389, %vm390
  %v392 = vsel %vm391, %v384, %v388
  %v393 = vand.u32 2147483647, %v383
  %vm394 = vcmp.eq.f32.partialorder %v393, 8.507059e+37
  %v395 = vand.u32 %v383, 2147483648
  %v396 = vor.u32 1.1754944e-38, %v395
  %v397 = vsel %vm394, %v396, %v392
  %v398 = vmul.f32 1.0, %v397
  %v399 = vtanh.pop %v379
  %v400 = vxor.u32 %v379, 2147483648
  %v401 = vmul.f32 %v400, 1.442695
  %v402 = vpow.pop %v401
  %v403 = vadd.f32 %v402, 1.0
  %v404 = vrcp.pop %v403
  %v405 = vmul.f32 %v403, %v404
  %v406 = vsub.f32 1.0, %v405
  %v407 = vmul.f32 %v404, %v406
  %v408 = vadd.f32 %v404, %v407
  %vm409 = vweird.f32 %v403
  %vm410 = vweird.f32 %v404
  %vm411 = vmor %vm409, %vm410
  %v412 = vsel %vm411, %v404, %v408
  %v413 = vand.u32 2147483647, %v403
  %vm414 = vcmp.eq.f32.partialorder %v413, 8.507059e+37
  %v415 = vand.u32 %v403, 2147483648
  %v416 = vor.u32 1.1754944e-38, %v415
  %v417 = vsel %vm414, %v416, %v412
  %v418 = vmul.f32 1.0, %v417
  %v419 = vmul.f32 %v398, %v190
  %v420 = vmul.f32 %v398, %v399
  %422 = vrot.lane.b32.xlu0 %v420, 64
  %v423 = vpop.permute.xlu0 %422
  %v425 = vadd.f32 %v419, %v423
  %v426 = vtanh.pop %v425
  %v427 = vmul.f32 %v418, %v426
  %429 = vrot.lane.b32.xlu0 %v334, 64
  %v430 = vpop.permute.xlu0 %429
  %v431 = vsel %vm95, %v430, 0
  %433 = vmatpush.msra.mxu0 0.0
  %434 = vmatpush.msra.mxu0 0.0
  %435 = vmatpush.msra.mxu0 0.0
  %436 = vmatpush.msra.mxu0 0.0
  %437 = vmatpush.msra.mxu0 0.0
  %438 = vmatpush.msra.mxu0 0.0
  %439 = vmatpush.msra.mxu0 0.0
  %440 = vmatpush.msra.mxu0 0.0
  %441 = vmatpush.msra.mxu0 %v81
  %442 = vmatpush.msra.mxu0 %v79
  %443 = vmatpush.msra.mxu0 %v77
  %444 = vmatpush.msra.mxu0 %v75
  %445 = vmatpush.msra.mxu0 %v73
  %446 = vmatpush.msra.mxu0 %v71
  %447 = vmatpush.msra.mxu0 %v69
  %448 = vmatpush.msra.mxu0 %v67
  %449 = vmatmul.f32.gmra.mxu0 %v431
  %v450 = vpop.f32.mrf.mxu0
  %v451 = vadd.f32 0.0, %v450
  %452 = vdwg.mxu0
  %453 = vmatpush.msra.mxu0 0.0
  %454 = vmatpush.msra.mxu0 0.0
  %455 = vmatpush.msra.mxu0 0.0
  %456 = vmatpush.msra.mxu0 0.0
  %457 = vmatpush.msra.mxu0 0.0
  %458 = vmatpush.msra.mxu0 0.0
  %459 = vmatpush.msra.mxu0 0.0
  %460 = vmatpush.msra.mxu0 0.0
  %461 = vmatpush.msra.mxu0 %v82
  %462 = vmatpush.msra.mxu0 %v80
  %463 = vmatpush.msra.mxu0 %v78
  %464 = vmatpush.msra.mxu0 %v76
  %465 = vmatpush.msra.mxu0 %v74
  %466 = vmatpush.msra.mxu0 %v72
  %467 = vmatpush.msra.mxu0 %v70
  %468 = vmatpush.msra.mxu0 %v68
  %469 = vmatmul.f32.gmra.mxu0 %v431
  %v470 = vpop.f32.mrf.mxu0
  %v471 = vadd.f32 0.0, %v470
  %472 = vdwg.mxu0
  %474 = vrot.lane.b32.xlu0 %v427, 64
  %v475 = vpop.permute.xlu0 %474
  %v476 = vsel %vm95, %v475, 0
  %478 = vmatpush.msra.mxu0 0.0
  %479 = vmatpush.msra.mxu0 0.0
  %480 = vmatpush.msra.mxu0 0.0
  %481 = vmatpush.msra.mxu0 0.0
  %482 = vmatpush.msra.mxu0 0.0
  %483 = vmatpush.msra.mxu0 0.0
  %484 = vmatpush.msra.mxu0 0.0
  %485 = vmatpush.msra.mxu0 0.0
  %486 = vmatpush.msra.mxu0 %v65
  %487 = vmatpush.msra.mxu0 %v63
  %488 = vmatpush.msra.mxu0 %v61
  %489 = vmatpush.msra.mxu0 %v59
  %490 = vmatpush.msra.mxu0 %v57
  %491 = vmatpush.msra.mxu0 %v55
  %492 = vmatpush.msra.mxu0 %v53
  %493 = vmatpush.msra.mxu0 %v51
  %494 = vmatmul.f32.gmra.mxu0 %v476
  %v495 = vpop.f32.mrf.mxu0
  %v496 = vadd.f32 %v451, %v495
  %497 = vdwg.mxu0
  %498 = vmatpush.msra.mxu0 0.0
  %499 = vmatpush.msra.mxu0 0.0
  %500 = vmatpush.msra.mxu0 0.0
  %501 = vmatpush.msra.mxu0 0.0
  %502 = vmatpush.msra.mxu0 0.0
  %503 = vmatpush.msra.mxu0 0.0
  %504 = vmatpush.msra.mxu0 0.0
  %505 = vmatpush.msra.mxu0 0.0
  %506 = vmatpush.msra.mxu0 %v66
  %507 = vmatpush.msra.mxu0 %v64
  %508 = vmatpush.msra.mxu0 %v62
  %509 = vmatpush.msra.mxu0 %v60
  %510 = vmatpush.msra.mxu0 %v58
  %511 = vmatpush.msra.mxu0 %v56
  %512 = vmatpush.msra.mxu0 %v54
  %513 = vmatpush.msra.mxu0 %v52
  %514 = vmatmul.f32.gmra.mxu0 %v476
  %v515 = vpop.f32.mrf.mxu0
  %v516 = vadd.f32 %v471, %v515
  %517 = vdwg.mxu0
  %v518 = vadd.f32 %v496, %v85
  %v519 = vadd.f32 %v516, %v86
  %v520 = vxor.u32 %v518, 2147483648
  %v521 = vmul.f32 %v520, 1.442695
  %v522 = vpow.pop %v521
  %v523 = vadd.f32 %v522, 1.0
  %v524 = vrcp.pop %v523
  %v525 = vmul.f32 %v523, %v524
  %v526 = vsub.f32 1.0, %v525
  %v527 = vmul.f32 %v524, %v526
  %v528 = vadd.f32 %v524, %v527
  %vm529 = vweird.f32 %v523
  %vm530 = vweird.f32 %v524
  %vm531 = vmor %vm529, %vm530
  %v532 = vsel %vm531, %v524, %v528
  %v533 = vand.u32 2147483647, %v523
  %vm534 = vcmp.eq.f32.partialorder %v533, 8.507059e+37
  %v535 = vand.u32 %v523, 2147483648
  %v536 = vor.u32 1.1754944e-38, %v535
  %v537 = vsel %vm534, %v536, %v532
  %v538 = vmul.f32 1.0, %v537
  %v539 = vtanh.pop %v519
  %v540 = vxor.u32 %v519, 2147483648
  %v541 = vmul.f32 %v540, 1.442695
  %v542 = vpow.pop %v541
  %v543 = vadd.f32 %v542, 1.0
  %v544 = vrcp.pop %v543
  %v545 = vmul.f32 %v543, %v544
  %v546 = vsub.f32 1.0, %v545
  %v547 = vmul.f32 %v544, %v546
  %v548 = vadd.f32 %v544, %v547
  %vm549 = vweird.f32 %v543
  %vm550 = vweird.f32 %v544
  %vm551 = vmor %vm549, %vm550
  %v552 = vsel %vm551, %v544, %v548
  %v553 = vand.u32 2147483647, %v543
  %vm554 = vcmp.eq.f32.partialorder %v553, 8.507059e+37
  %v555 = vand.u32 %v543, 2147483648
  %v556 = vor.u32 1.1754944e-38, %v555
  %v557 = vsel %vm554, %v556, %v552
  %v558 = vmul.f32 1.0, %v557
  %v559 = vmul.f32 %v538, %v332
  %v560 = vmul.f32 %v538, %v539
  %562 = vrot.lane.b32.xlu0 %v560, 64
  %v563 = vpop.permute.xlu0 %562
  %v565 = vadd.f32 %v559, %v563
  %v566 = vtanh.pop %v565
  %v567 = vmul.f32 %v558, %v566
  %s568 = scalar_lea.vmem %s0, 32
  %v569 = vld [vmem:[%s568] sm:$0xff]
  %v570 = vld [vmem:[%s568 + $0x8] sm:$0xff]
  %571 = vmatpush.msra.mxu0 0.0
  %572 = vmatpush.msra.mxu0 0.0
  %573 = vmatpush.msra.mxu0 0.0
  %574 = vmatpush.msra.mxu0 0.0
  %575 = vmatpush.msra.mxu0 0.0
  %576 = vmatpush.msra.mxu0 0.0
  %577 = vmatpush.msra.mxu0 0.0
  %578 = vmatpush.msra.mxu0 0.0
  %579 = vmatpush.msra.mxu0 %v49
  %580 = vmatpush.msra.mxu0 %v47
  %581 = vmatpush.msra.mxu0 %v45
  %582 = vmatpush.msra.mxu0 %v43
  %583 = vmatpush.msra.mxu0 %v41
  %584 = vmatpush.msra.mxu0 %v39
  %585 = vmatpush.msra.mxu0 %v37
  %586 = vmatpush.msra.mxu0 %v35
  %587 = vmatmul.f32.gmra.mxu0 %v476
  %v588 = vpop.f32.mrf.mxu0
  %v589 = vadd.f32 0.0, %v588
  %590 = vdwg.mxu0
  %591 = vmatpush.msra.mxu0 0.0
  %592 = vmatpush.msra.mxu0 0.0
  %593 = vmatpush.msra.mxu0 0.0
  %594 = vmatpush.msra.mxu0 0.0
  %595 = vmatpush.msra.mxu0 0.0
  %596 = vmatpush.msra.mxu0 0.0
  %597 = vmatpush.msra.mxu0 0.0
  %598 = vmatpush.msra.mxu0 0.0
  %599 = vmatpush.msra.mxu0 %v50
  %600 = vmatpush.msra.mxu0 %v48
  %601 = vmatpush.msra.mxu0 %v46
  %602 = vmatpush.msra.mxu0 %v44
  %603 = vmatpush.msra.mxu0 %v42
  %604 = vmatpush.msra.mxu0 %v40
  %605 = vmatpush.msra.mxu0 %v38
  %606 = vmatpush.msra.mxu0 %v36
  %607 = vmatmul.f32.gmra.mxu0 %v476
  %v608 = vpop.f32.mrf.mxu0
  %v609 = vadd.f32 0.0, %v608
  %610 = vdwg.mxu0
  %v611 = vadd.f32 %v569, %v589
  %v612 = vadd.f32 %v570, %v609
  %v613 = vxor.u32 %v611, 2147483648
  %v614 = vmul.f32 %v613, 1.442695
  %v615 = vpow.pop %v614
  %v616 = vadd.f32 %v615, 1.0
  %v617 = vrcp.pop %v616
  %v618 = vmul.f32 %v616, %v617
  %v619 = vsub.f32 1.0, %v618
  %v620 = vmul.f32 %v617, %v619
  %v621 = vadd.f32 %v617, %v620
  %vm622 = vweird.f32 %v616
  %vm623 = vweird.f32 %v617
  %vm624 = vmor %vm622, %vm623
  %v625 = vsel %vm624, %v617, %v621
  %v626 = vand.u32 2147483647, %v616
  %vm627 = vcmp.eq.f32.partialorder %v626, 8.507059e+37
  %v628 = vand.u32 %v616, 2147483648
  %v629 = vor.u32 1.1754944e-38, %v628
  %v630 = vsel %vm627, %v629, %v625
  %v631 = vmul.f32 1.0, %v630
  %v632 = vtanh.pop %v612
  %v633 = vxor.u32 %v612, 2147483648
  %v634 = vmul.f32 %v633, 1.442695
  %v635 = vpow.pop %v634
  %v636 = vadd.f32 %v635, 1.0
  %v637 = vrcp.pop %v636
  %v638 = vmul.f32 %v636, %v637
  %v639 = vsub.f32 1.0, %v638
  %v640 = vmul.f32 %v637, %v639
  %v641 = vadd.f32 %v637, %v640
  %vm642 = vweird.f32 %v636
  %vm643 = vweird.f32 %v637
  %vm644 = vmor %vm642, %vm643
  %v645 = vsel %vm644, %v637, %v641
  %v646 = vand.u32 2147483647, %v636
  %vm647 = vcmp.eq.f32.partialorder %v646, 8.507059e+37
  %v648 = vand.u32 %v636, 2147483648
  %v649 = vor.u32 1.1754944e-38, %v648
  %v650 = vsel %vm647, %v649, %v645
  %v651 = vmul.f32 1.0, %v650
  %v652 = vmul.f32 %v631, %v425
  %v653 = vmul.f32 %v631, %v632
  %655 = vrot.lane.b32.xlu0 %v653, 64
  %v656 = vpop.permute.xlu0 %655
  %v658 = vadd.f32 %v652, %v656
  %v659 = vtanh.pop %v658
  %v660 = vmul.f32 %v651, %v659
  %662 = vrot.lane.b32.xlu0 %v567, 64
  %v663 = vpop.permute.xlu0 %662
  %v664 = vsel %vm95, %v663, 0
  %666 = vmatpush.msra.mxu0 0.0
  %667 = vmatpush.msra.mxu0 0.0
  %668 = vmatpush.msra.mxu0 0.0
  %669 = vmatpush.msra.mxu0 0.0
  %670 = vmatpush.msra.mxu0 0.0
  %671 = vmatpush.msra.mxu0 0.0
  %672 = vmatpush.msra.mxu0 0.0
  %673 = vmatpush.msra.mxu0 0.0
  %674 = vmatpush.msra.mxu0 %v81
  %675 = vmatpush.msra.mxu0 %v79
  %676 = vmatpush.msra.mxu0 %v77
  %677 = vmatpush.msra.mxu0 %v75
  %678 = vmatpush.msra.mxu0 %v73
  %679 = vmatpush.msra.mxu0 %v71
  %680 = vmatpush.msra.mxu0 %v69
  %681 = vmatpush.msra.mxu0 %v67
  %682 = vmatmul.f32.gmra.mxu0 %v664
  %v683 = vpop.f32.mrf.mxu0
  %v684 = vadd.f32 0.0, %v683
  %685 = vdwg.mxu0
  %686 = vmatpush.msra.mxu0 0.0
  %687 = vmatpush.msra.mxu0 0.0
  %688 = vmatpush.msra.mxu0 0.0
  %689 = vmatpush.msra.mxu0 0.0
  %690 = vmatpush.msra.mxu0 0.0
  %691 = vmatpush.msra.mxu0 0.0
  %692 = vmatpush.msra.mxu0 0.0
  %693 = vmatpush.msra.mxu0 0.0
  %694 = vmatpush.msra.mxu0 %v82
  %695 = vmatpush.msra.mxu0 %v80
  %696 = vmatpush.msra.mxu0 %v78
  %697 = vmatpush.msra.mxu0 %v76
  %698 = vmatpush.msra.mxu0 %v74
  %699 = vmatpush.msra.mxu0 %v72
  %700 = vmatpush.msra.mxu0 %v70
  %701 = vmatpush.msra.mxu0 %v68
  %702 = vmatmul.f32.gmra.mxu0 %v664
  %v703 = vpop.f32.mrf.mxu0
  %v704 = vadd.f32 0.0, %v703
  %705 = vdwg.mxu0
  %707 = vrot.lane.b32.xlu0 %v660, 64
  %v708 = vpop.permute.xlu0 %707
  %v709 = vsel %vm95, %v708, 0
  %711 = vmatpush.msra.mxu0 0.0
  %712 = vmatpush.msra.mxu0 0.0
  %713 = vmatpush.msra.mxu0 0.0
  %714 = vmatpush.msra.mxu0 0.0
  %715 = vmatpush.msra.mxu0 0.0
  %716 = vmatpush.msra.mxu0 0.0
  %717 = vmatpush.msra.mxu0 0.0
  %718 = vmatpush.msra.mxu0 0.0
  %719 = vmatpush.msra.mxu0 %v65
  %720 = vmatpush.msra.mxu0 %v63
  %721 = vmatpush.msra.mxu0 %v61
  %722 = vmatpush.msra.mxu0 %v59
  %723 = vmatpush.msra.mxu0 %v57
  %724 = vmatpush.msra.mxu0 %v55
  %725 = vmatpush.msra.mxu0 %v53
  %726 = vmatpush.msra.mxu0 %v51
  %727 = vmatmul.f32.gmra.mxu0 %v709
  %v728 = vpop.f32.mrf.mxu0
  %v729 = vadd.f32 %v684, %v728
  %730 = vdwg.mxu0
  %731 = vmatpush.msra.mxu0 0.0
  %732 = vmatpush.msra.mxu0 0.0
  %733 = vmatpush.msra.mxu0 0.0
  %734 = vmatpush.msra.mxu0 0.0
  %735 = vmatpush.msra.mxu0 0.0
  %736 = vmatpush.msra.mxu0 0.0
  %737 = vmatpush.msra.mxu0 0.0
  %738 = vmatpush.msra.mxu0 0.0
  %739 = vmatpush.msra.mxu0 %v66
  %740 = vmatpush.msra.mxu0 %v64
  %741 = vmatpush.msra.mxu0 %v62
  %742 = vmatpush.msra.mxu0 %v60
  %743 = vmatpush.msra.mxu0 %v58
  %744 = vmatpush.msra.mxu0 %v56
  %745 = vmatpush.msra.mxu0 %v54
  %746 = vmatpush.msra.mxu0 %v52
  %747 = vmatmul.f32.gmra.mxu0 %v709
  %v748 = vpop.f32.mrf.mxu0
  %v749 = vadd.f32 %v704, %v748
  %750 = vdwg.mxu0
  %v751 = vadd.f32 %v729, %v85
  %v752 = vadd.f32 %v749, %v86
  %v753 = vxor.u32 %v751, 2147483648
  %v754 = vmul.f32 %v753, 1.442695
  %v755 = vpow.pop %v754
  %v756 = vadd.f32 %v755, 1.0
  %v757 = vrcp.pop %v756
  %v758 = vmul.f32 %v756, %v757
  %v759 = vsub.f32 1.0, %v758
  %v760 = vmul.f32 %v757, %v759
  %v761 = vadd.f32 %v757, %v760
  %vm762 = vweird.f32 %v756
  %vm763 = vweird.f32 %v757
  %vm764 = vmor %vm762, %vm763
  %v765 = vsel %vm764, %v757, %v761
  %v766 = vand.u32 2147483647, %v756
  %vm767 = vcmp.eq.f32.partialorder %v766, 8.507059e+37
  %v768 = vand.u32 %v756, 2147483648
  %v769 = vor.u32 1.1754944e-38, %v768
  %v770 = vsel %vm767, %v769, %v765
  %v771 = vmul.f32 1.0, %v770
  %v772 = vtanh.pop %v752
  %v773 = vxor.u32 %v752, 2147483648
  %v774 = vmul.f32 %v773, 1.442695
  %v775 = vpow.pop %v774
  %v776 = vadd.f32 %v775, 1.0
  %v777 = vrcp.pop %v776
  %v778 = vmul.f32 %v776, %v777
  %v779 = vsub.f32 1.0, %v778
  %v780 = vmul.f32 %v777, %v779
  %v781 = vadd.f32 %v777, %v780
  %vm782 = vweird.f32 %v776
  %vm783 = vweird.f32 %v777
  %vm784 = vmor %vm782, %vm783
  %v785 = vsel %vm784, %v777, %v781
  %v786 = vand.u32 2147483647, %v776
  %vm787 = vcmp.eq.f32.partialorder %v786, 8.507059e+37
  %v788 = vand.u32 %v776, 2147483648
  %v789 = vor.u32 1.1754944e-38, %v788
  %v790 = vsel %vm787, %v789, %v785
  %v791 = vmul.f32 1.0, %v790
  %v792 = vmul.f32 %v771, %v565
  %v793 = vmul.f32 %v771, %v772
  %795 = vrot.lane.b32.xlu0 %v793, 64
  %v796 = vpop.permute.xlu0 %795
  %v798 = vadd.f32 %v792, %v796
  %v799 = vtanh.pop %v798
  %v800 = vmul.f32 %v791, %v799
  %s801 = scalar_lea.vmem %s0, 48
  %v802 = vld [vmem:[%s801] sm:$0xff]
  %v803 = vld [vmem:[%s801 + $0x8] sm:$0xff]
  %804 = vmatpush.msra.mxu0 0.0
  %805 = vmatpush.msra.mxu0 0.0
  %806 = vmatpush.msra.mxu0 0.0
  %807 = vmatpush.msra.mxu0 0.0
  %808 = vmatpush.msra.mxu0 0.0
  %809 = vmatpush.msra.mxu0 0.0
  %810 = vmatpush.msra.mxu0 0.0
  %811 = vmatpush.msra.mxu0 0.0
  %812 = vmatpush.msra.mxu0 %v49
  %813 = vmatpush.msra.mxu0 %v47
  %814 = vmatpush.msra.mxu0 %v45
  %815 = vmatpush.msra.mxu0 %v43
  %816 = vmatpush.msra.mxu0 %v41
  %817 = vmatpush.msra.mxu0 %v39
  %818 = vmatpush.msra.mxu0 %v37
  %819 = vmatpush.msra.mxu0 %v35
  %820 = vmatmul.f32.gmra.mxu0 %v709
  %v821 = vpop.f32.mrf.mxu0
  %v822 = vadd.f32 0.0, %v821
  %823 = vdwg.mxu0
  %824 = vmatpush.msra.mxu0 0.0
  %825 = vmatpush.msra.mxu0 0.0
  %826 = vmatpush.msra.mxu0 0.0
  %827 = vmatpush.msra.mxu0 0.0
  %828 = vmatpush.msra.mxu0 0.0
  %829 = vmatpush.msra.mxu0 0.0
  %830 = vmatpush.msra.mxu0 0.0
  %831 = vmatpush.msra.mxu0 0.0
  %832 = vmatpush.msra.mxu0 %v50
  %833 = vmatpush.msra.mxu0 %v48
  %834 = vmatpush.msra.mxu0 %v46
  %835 = vmatpush.msra.mxu0 %v44
  %836 = vmatpush.msra.mxu0 %v42
  %837 = vmatpush.msra.mxu0 %v40
  %838 = vmatpush.msra.mxu0 %v38
  %839 = vmatpush.msra.mxu0 %v36
  %840 = vmatmul.f32.gmra.mxu0 %v709
  %v841 = vpop.f32.mrf.mxu0
  %v842 = vadd.f32 0.0, %v841
  %843 = vdwg.mxu0
  %v844 = vadd.f32 %v802, %v822
  %v845 = vadd.f32 %v803, %v842
  %v846 = vxor.u32 %v844, 2147483648
  %v847 = vmul.f32 %v846, 1.442695
  %v848 = vpow.pop %v847
  %v849 = vadd.f32 %v848, 1.0
  %v850 = vrcp.pop %v849
  %v851 = vmul.f32 %v849, %v850
  %v852 = vsub.f32 1.0, %v851
  %v853 = vmul.f32 %v850, %v852
  %v854 = vadd.f32 %v850, %v853
  %vm855 = vweird.f32 %v849
  %vm856 = vweird.f32 %v850
  %vm857 = vmor %vm855, %vm856
  %v858 = vsel %vm857, %v850, %v854
  %v859 = vand.u32 2147483647, %v849
  %vm860 = vcmp.eq.f32.partialorder %v859, 8.507059e+37
  %v861 = vand.u32 %v849, 2147483648
  %v862 = vor.u32 1.1754944e-38, %v861
  %v863 = vsel %vm860, %v862, %v858
  %v864 = vmul.f32 1.0, %v863
  %v865 = vtanh.pop %v845
  %v866 = vxor.u32 %v845, 2147483648
  %v867 = vmul.f32 %v866, 1.442695
  %v868 = vpow.pop %v867
  %v869 = vadd.f32 %v868, 1.0
  %v870 = vrcp.pop %v869
  %v871 = vmul.f32 %v869, %v870
  %v872 = vsub.f32 1.0, %v871
  %v873 = vmul.f32 %v870, %v872
  %v874 = vadd.f32 %v870, %v873
  %vm875 = vweird.f32 %v869
  %vm876 = vweird.f32 %v870
  %vm877 = vmor %vm875, %vm876
  %v878 = vsel %vm877, %v870, %v874
  %v879 = vand.u32 2147483647, %v869
  %vm880 = vcmp.eq.f32.partialorder %v879, 8.507059e+37
  %v881 = vand.u32 %v869, 2147483648
  %v882 = vor.u32 1.1754944e-38, %v881
  %v883 = vsel %vm880, %v882, %v878
  %v884 = vmul.f32 1.0, %v883
  %v885 = vmul.f32 %v864, %v658
  %v886 = vmul.f32 %v864, %v865
  %888 = vrot.lane.b32.xlu0 %v886, 64
  %v889 = vpop.permute.xlu0 %888
  %v891 = vadd.f32 %v885, %v889
  %v892 = vtanh.pop %v891
  %v893 = vmul.f32 %v884, %v892
  %895 = vrot.lane.b32.xlu0 %v800, 64
  %v896 = vpop.permute.xlu0 %895
  %v897 = vsel %vm95, %v896, 0
  %899 = vmatpush.msra.mxu0 0.0
  %900 = vmatpush.msra.mxu0 0.0
  %901 = vmatpush.msra.mxu0 0.0
  %902 = vmatpush.msra.mxu0 0.0
  %903 = vmatpush.msra.mxu0 0.0
  %904 = vmatpush.msra.mxu0 0.0
  %905 = vmatpush.msra.mxu0 0.0
  %906 = vmatpush.msra.mxu0 0.0
  %907 = vmatpush.msra.mxu0 %v81
  %908 = vmatpush.msra.mxu0 %v79
  %909 = vmatpush.msra.mxu0 %v77
  %910 = vmatpush.msra.mxu0 %v75
  %911 = vmatpush.msra.mxu0 %v73
  %912 = vmatpush.msra.mxu0 %v71
  %913 = vmatpush.msra.mxu0 %v69
  %914 = vmatpush.msra.mxu0 %v67
  %915 = vmatmul.f32.gmra.mxu0 %v897
  %v916 = vpop.f32.mrf.mxu0
  %v917 = vadd.f32 0.0, %v916
  %918 = vdwg.mxu0
  %919 = vmatpush.msra.mxu0 0.0
  %920 = vmatpush.msra.mxu0 0.0
  %921 = vmatpush.msra.mxu0 0.0
  %922 = vmatpush.msra.mxu0 0.0
  %923 = vmatpush.msra.mxu0 0.0
  %924 = vmatpush.msra.mxu0 0.0
  %925 = vmatpush.msra.mxu0 0.0
  %926 = vmatpush.msra.mxu0 0.0
  %927 = vmatpush.msra.mxu0 %v82
  %928 = vmatpush.msra.mxu0 %v80
  %929 = vmatpush.msra.mxu0 %v78
  %930 = vmatpush.msra.mxu0 %v76
  %931 = vmatpush.msra.mxu0 %v74
  %932 = vmatpush.msra.mxu0 %v72
  %933 = vmatpush.msra.mxu0 %v70
  %934 = vmatpush.msra.mxu0 %v68
  %935 = vmatmul.f32.gmra.mxu0 %v897
  %v936 = vpop.f32.mrf.mxu0
  %v937 = vadd.f32 0.0, %v936
  %938 = vdwg.mxu0
  %940 = vrot.lane.b32.xlu0 %v893, 64
  %v941 = vpop.permute.xlu0 %940
  %v942 = vsel %vm95, %v941, 0
  %944 = vmatpush.msra.mxu0 0.0
  %945 = vmatpush.msra.mxu0 0.0
  %946 = vmatpush.msra.mxu0 0.0
  %947 = vmatpush.msra.mxu0 0.0
  %948 = vmatpush.msra.mxu0 0.0
  %949 = vmatpush.msra.mxu0 0.0
  %950 = vmatpush.msra.mxu0 0.0
  %951 = vmatpush.msra.mxu0 0.0
  %952 = vmatpush.msra.mxu0 %v65
  %953 = vmatpush.msra.mxu0 %v63
  %954 = vmatpush.msra.mxu0 %v61
  %955 = vmatpush.msra.mxu0 %v59
  %956 = vmatpush.msra.mxu0 %v57
  %957 = vmatpush.msra.mxu0 %v55
  %958 = vmatpush.msra.mxu0 %v53
  %959 = vmatpush.msra.mxu0 %v51
  %960 = vmatmul.f32.gmra.mxu0 %v942
  %v961 = vpop.f32.mrf.mxu0
  %v962 = vadd.f32 %v917, %v961
  %963 = vdwg.mxu0
  %964 = vmatpush.msra.mxu0 0.0
  %965 = vmatpush.msra.mxu0 0.0
  %966 = vmatpush.msra.mxu0 0.0
  %967 = vmatpush.msra.mxu0 0.0
  %968 = vmatpush.msra.mxu0 0.0
  %969 = vmatpush.msra.mxu0 0.0
  %970 = vmatpush.msra.mxu0 0.0
  %971 = vmatpush.msra.mxu0 0.0
  %972 = vmatpush.msra.mxu0 %v66
  %973 = vmatpush.msra.mxu0 %v64
  %974 = vmatpush.msra.mxu0 %v62
  %975 = vmatpush.msra.mxu0 %v60
  %976 = vmatpush.msra.mxu0 %v58
  %977 = vmatpush.msra.mxu0 %v56
  %978 = vmatpush.msra.mxu0 %v54
  %979 = vmatpush.msra.mxu0 %v52
  %980 = vmatmul.f32.gmra.mxu0 %v942
  %v981 = vpop.f32.mrf.mxu0
  %v982 = vadd.f32 %v937, %v981
  %983 = vdwg.mxu0
  %v984 = vadd.f32 %v962, %v85
  %v985 = vadd.f32 %v982, %v86
  %v986 = vxor.u32 %v984, 2147483648
  %v987 = vmul.f32 %v986, 1.442695
  %v988 = vpow.pop %v987
  %v989 = vadd.f32 %v988, 1.0
  %v990 = vrcp.pop %v989
  %v991 = vmul.f32 %v989, %v990
  %v992 = vsub.f32 1.0, %v991
  %v993 = vmul.f32 %v990, %v992
  %v994 = vadd.f32 %v990, %v993
  %vm995 = vweird.f32 %v989
  %vm996 = vweird.f32 %v990
  %vm997 = vmor %vm995, %vm996
  %v998 = vsel %vm997, %v990, %v994
  %v999 = vand.u32 2147483647, %v989
  %vm1000 = vcmp.eq.f32.partialorder %v999, 8.507059e+37
  %v1001 = vand.u32 %v989, 2147483648
  %v1002 = vor.u32 1.1754944e-38, %v1001
  %v1003 = vsel %vm1000, %v1002, %v998
  %v1004 = vmul.f32 1.0, %v1003
  %v1005 = vtanh.pop %v985
  %v1006 = vxor.u32 %v985, 2147483648
  %v1007 = vmul.f32 %v1006, 1.442695
  %v1008 = vpow.pop %v1007
  %v1009 = vadd.f32 %v1008, 1.0
  %v1010 = vrcp.pop %v1009
  %v1011 = vmul.f32 %v1009, %v1010
  %v1012 = vsub.f32 1.0, %v1011
  %v1013 = vmul.f32 %v1010, %v1012
  %v1014 = vadd.f32 %v1010, %v1013
  %vm1015 = vweird.f32 %v1009
  %vm1016 = vweird.f32 %v1010
  %vm1017 = vmor %vm1015, %vm1016
  %v1018 = vsel %vm1017, %v1010, %v1014
  %v1019 = vand.u32 2147483647, %v1009
  %vm1020 = vcmp.eq.f32.partialorder %v1019, 8.507059e+37
  %v1021 = vand.u32 %v1009, 2147483648
  %v1022 = vor.u32 1.1754944e-38, %v1021
  %v1023 = vsel %vm1020, %v1022, %v1018
  %v1024 = vmul.f32 1.0, %v1023
  %v1025 = vmul.f32 %v1004, %v798
  %v1026 = vmul.f32 %v1004, %v1005
  %1028 = vrot.lane.b32.xlu0 %v1026, 64
  %v1029 = vpop.permute.xlu0 %1028
  %v1031 = vadd.f32 %v1025, %v1029
  %v1032 = vtanh.pop %v1031
  %v1033 = vmul.f32 %v1024, %v1032
  %s1034 = scalar_lea.vmem %s0, 64
  %v1035 = vld [vmem:[%s1034] sm:$0xff]
  %v1036 = vld [vmem:[%s1034 + $0x8] sm:$0xff]
  %1037 = vmatpush.msra.mxu0 0.0
  %1038 = vmatpush.msra.mxu0 0.0
  %1039 = vmatpush.msra.mxu0 0.0
  %1040 = vmatpush.msra.mxu0 0.0
  %1041 = vmatpush.msra.mxu0 0.0
  %1042 = vmatpush.msra.mxu0 0.0
  %1043 = vmatpush.msra.mxu0 0.0
  %1044 = vmatpush.msra.mxu0 0.0
  %1045 = vmatpush.msra.mxu0 %v49
  %1046 = vmatpush.msra.mxu0 %v47
  %1047 = vmatpush.msra.mxu0 %v45
  %1048 = vmatpush.msra.mxu0 %v43
  %1049 = vmatpush.msra.mxu0 %v41
  %1050 = vmatpush.msra.mxu0 %v39
  %1051 = vmatpush.msra.mxu0 %v37
  %1052 = vmatpush.msra.mxu0 %v35
  %1053 = vmatmul.f32.gmra.mxu0 %v942
  %v1054 = vpop.f32.mrf.mxu0
  %v1055 = vadd.f32 0.0, %v1054
  %1056 = vdwg.mxu0
  %1057 = vmatpush.msra.mxu0 0.0
  %1058 = vmatpush.msra.mxu0 0.0
  %1059 = vmatpush.msra.mxu0 0.0
  %1060 = vmatpush.msra.mxu0 0.0
  %1061 = vmatpush.msra.mxu0 0.0
  %1062 = vmatpush.msra.mxu0 0.0
  %1063 = vmatpush.msra.mxu0 0.0
  %1064 = vmatpush.msra.mxu0 0.0
  %1065 = vmatpush.msra.mxu0 %v50
  %1066 = vmatpush.msra.mxu0 %v48
  %1067 = vmatpush.msra.mxu0 %v46
  %1068 = vmatpush.msra.mxu0 %v44
  %1069 = vmatpush.msra.mxu0 %v42
  %1070 = vmatpush.msra.mxu0 %v40
  %1071 = vmatpush.msra.mxu0 %v38
  %1072 = vmatpush.msra.mxu0 %v36
  %1073 = vmatmul.f32.gmra.mxu0 %v942
  %v1074 = vpop.f32.mrf.mxu0
  %v1075 = vadd.f32 0.0, %v1074
  %1076 = vdwg.mxu0
  %v1077 = vadd.f32 %v1035, %v1055
  %v1078 = vadd.f32 %v1036, %v1075
  %v1079 = vxor.u32 %v1077, 2147483648
  %v1080 = vmul.f32 %v1079, 1.442695
  %v1081 = vpow.pop %v1080
  %v1082 = vadd.f32 %v1081, 1.0
  %v1083 = vrcp.pop %v1082
  %v1084 = vmul.f32 %v1082, %v1083
  %v1085 = vsub.f32 1.0, %v1084
  %v1086 = vmul.f32 %v1083, %v1085
  %v1087 = vadd.f32 %v1083, %v1086
  %vm1088 = vweird.f32 %v1082
  %vm1089 = vweird.f32 %v1083
  %vm1090 = vmor %vm1088, %vm1089
  %v1091 = vsel %vm1090, %v1083, %v1087
  %v1092 = vand.u32 2147483647, %v1082
  %vm1093 = vcmp.eq.f32.partialorder %v1092, 8.507059e+37
  %v1094 = vand.u32 %v1082, 2147483648
  %v1095 = vor.u32 1.1754944e-38, %v1094
  %v1096 = vsel %vm1093, %v1095, %v1091
  %v1097 = vmul.f32 1.0, %v1096
  %v1098 = vtanh.pop %v1078
  %v1099 = vxor.u32 %v1078, 2147483648
  %v1100 = vmul.f32 %v1099, 1.442695
  %v1101 = vpow.pop %v1100
  %v1102 = vadd.f32 %v1101, 1.0
  %v1103 = vrcp.pop %v1102
  %v1104 = vmul.f32 %v1102, %v1103
  %v1105 = vsub.f32 1.0, %v1104
  %v1106 = vmul.f32 %v1103, %v1105
  %v1107 = vadd.f32 %v1103, %v1106
  %vm1108 = vweird.f32 %v1102
  %vm1109 = vweird.f32 %v1103
  %vm1110 = vmor %vm1108, %vm1109
  %v1111 = vsel %vm1110, %v1103, %v1107
  %v1112 = vand.u32 2147483647, %v1102
  %vm1113 = vcmp.eq.f32.partialorder %v1112, 8.507059e+37
  %v1114 = vand.u32 %v1102, 2147483648
  %v1115 = vor.u32 1.1754944e-38, %v1114
  %v1116 = vsel %vm1113, %v1115, %v1111
  %v1117 = vmul.f32 1.0, %v1116
  %v1118 = vmul.f32 %v1097, %v891
  %v1119 = vmul.f32 %v1097, %v1098
  %1121 = vrot.lane.b32.xlu0 %v1119, 64
  %v1122 = vpop.permute.xlu0 %1121
  %v1124 = vadd.f32 %v1118, %v1122
  %v1125 = vtanh.pop %v1124
  %v1126 = vmul.f32 %v1117, %v1125
  %1128 = vrot.lane.b32.xlu0 %v1033, 64
  %v1129 = vpop.permute.xlu0 %1128
  %v1130 = vsel %vm95, %v1129, 0
  %1132 = vmatpush.msra.mxu0 0.0
  %1133 = vmatpush.msra.mxu0 0.0
  %1134 = vmatpush.msra.mxu0 0.0
  %1135 = vmatpush.msra.mxu0 0.0
  %1136 = vmatpush.msra.mxu0 0.0
  %1137 = vmatpush.msra.mxu0 0.0
  %1138 = vmatpush.msra.mxu0 0.0
  %1139 = vmatpush.msra.mxu0 0.0
  %1140 = vmatpush.msra.mxu0 %v81
  %1141 = vmatpush.msra.mxu0 %v79
  %1142 = vmatpush.msra.mxu0 %v77
  %1143 = vmatpush.msra.mxu0 %v75
  %1144 = vmatpush.msra.mxu0 %v73
  %1145 = vmatpush.msra.mxu0 %v71
  %1146 = vmatpush.msra.mxu0 %v69
  %1147 = vmatpush.msra.mxu0 %v67
  %1148 = vmatmul.f32.gmra.mxu0 %v1130
  %v1149 = vpop.f32.mrf.mxu0
  %v1150 = vadd.f32 0.0, %v1149
  %1151 = vdwg.mxu0
  %1152 = vmatpush.msra.mxu0 0.0
  %1153 = vmatpush.msra.mxu0 0.0
  %1154 = vmatpush.msra.mxu0 0.0
  %1155 = vmatpush.msra.mxu0 0.0
  %1156 = vmatpush.msra.mxu0 0.0
  %1157 = vmatpush.msra.mxu0 0.0
  %1158 = vmatpush.msra.mxu0 0.0
  %1159 = vmatpush.msra.mxu0 0.0
  %1160 = vmatpush.msra.mxu0 %v82
  %1161 = vmatpush.msra.mxu0 %v80
  %1162 = vmatpush.msra.mxu0 %v78
  %1163 = vmatpush.msra.mxu0 %v76
  %1164 = vmatpush.msra.mxu0 %v74
  %1165 = vmatpush.msra.mxu0 %v72
  %1166 = vmatpush.msra.mxu0 %v70
  %1167 = vmatpush.msra.mxu0 %v68
  %1168 = vmatmul.f32.gmra.mxu0 %v1130
  %v1169 = vpop.f32.mrf.mxu0
  %v1170 = vadd.f32 0.0, %v1169
  %1171 = vdwg.mxu0
  %1173 = vrot.lane.b32.xlu0 %v1126, 64
  %v1174 = vpop.permute.xlu0 %1173
  %v1175 = vsel %vm95, %v1174, 0
  %1177 = vmatpush.msra.mxu0 0.0
  %1178 = vmatpush.msra.mxu0 0.0
  %1179 = vmatpush.msra.mxu0 0.0
  %1180 = vmatpush.msra.mxu0 0.0
  %1181 = vmatpush.msra.mxu0 0.0
  %1182 = vmatpush.msra.mxu0 0.0
  %1183 = vmatpush.msra.mxu0 0.0
  %1184 = vmatpush.msra.mxu0 0.0
  %1185 = vmatpush.msra.mxu0 %v65
  %1186 = vmatpush.msra.mxu0 %v63
  %1187 = vmatpush.msra.mxu0 %v61
  %1188 = vmatpush.msra.mxu0 %v59
  %1189 = vmatpush.msra.mxu0 %v57
  %1190 = vmatpush.msra.mxu0 %v55
  %1191 = vmatpush.msra.mxu0 %v53
  %1192 = vmatpush.msra.mxu0 %v51
  %1193 = vmatmul.f32.gmra.mxu0 %v1175
  %v1194 = vpop.f32.mrf.mxu0
  %v1195 = vadd.f32 %v1150, %v1194
  %1196 = vdwg.mxu0
  %1197 = vmatpush.msra.mxu0 0.0
  %1198 = vmatpush.msra.mxu0 0.0
  %1199 = vmatpush.msra.mxu0 0.0
  %1200 = vmatpush.msra.mxu0 0.0
  %1201 = vmatpush.msra.mxu0 0.0
  %1202 = vmatpush.msra.mxu0 0.0
  %1203 = vmatpush.msra.mxu0 0.0
  %1204 = vmatpush.msra.mxu0 0.0
  %1205 = vmatpush.msra.mxu0 %v66
  %1206 = vmatpush.msra.mxu0 %v64
  %1207 = vmatpush.msra.mxu0 %v62
  %1208 = vmatpush.msra.mxu0 %v60
  %1209 = vmatpush.msra.mxu0 %v58
  %1210 = vmatpush.msra.mxu0 %v56
  %1211 = vmatpush.msra.mxu0 %v54
  %1212 = vmatpush.msra.mxu0 %v52
  %1213 = vmatmul.f32.gmra.mxu0 %v1175
  %v1214 = vpop.f32.mrf.mxu0
  %v1215 = vadd.f32 %v1170, %v1214
  %1216 = vdwg.mxu0
  %v1217 = vadd.f32 %v1195, %v85
  %v1218 = vadd.f32 %v1215, %v86
  %v1219 = vxor.u32 %v1217, 2147483648
  %v1220 = vmul.f32 %v1219, 1.442695
  %v1221 = vpow.pop %v1220
  %v1222 = vadd.f32 %v1221, 1.0
  %v1223 = vrcp.pop %v1222
  %v1224 = vmul.f32 %v1222, %v1223
  %v1225 = vsub.f32 1.0, %v1224
  %v1226 = vmul.f32 %v1223, %v1225
  %v1227 = vadd.f32 %v1223, %v1226
  %vm1228 = vweird.f32 %v1222
  %vm1229 = vweird.f32 %v1223
  %vm1230 = vmor %vm1228, %vm1229
  %v1231 = vsel %vm1230, %v1223, %v1227
  %v1232 = vand.u32 2147483647, %v1222
  %vm1233 = vcmp.eq.f32.partialorder %v1232, 8.507059e+37
  %v1234 = vand.u32 %v1222, 2147483648
  %v1235 = vor.u32 1.1754944e-38, %v1234
  %v1236 = vsel %vm1233, %v1235, %v1231
  %v1237 = vmul.f32 1.0, %v1236
  %v1238 = vtanh.pop %v1218
  %v1239 = vxor.u32 %v1218, 2147483648
  %v1240 = vmul.f32 %v1239, 1.442695
  %v1241 = vpow.pop %v1240
  %v1242 = vadd.f32 %v1241, 1.0
  %v1243 = vrcp.pop %v1242
  %v1244 = vmul.f32 %v1242, %v1243
  %v1245 = vsub.f32 1.0, %v1244
  %v1246 = vmul.f32 %v1243, %v1245
  %v1247 = vadd.f32 %v1243, %v1246
  %vm1248 = vweird.f32 %v1242
  %vm1249 = vweird.f32 %v1243
  %vm1250 = vmor %vm1248, %vm1249
  %v1251 = vsel %vm1250, %v1243, %v1247
  %v1252 = vand.u32 2147483647, %v1242
  %vm1253 = vcmp.eq.f32.partialorder %v1252, 8.507059e+37
  %v1254 = vand.u32 %v1242, 2147483648
  %v1255 = vor.u32 1.1754944e-38, %v1254
  %v1256 = vsel %vm1253, %v1255, %v1251
  %v1257 = vmul.f32 1.0, %v1256
  %v1258 = vmul.f32 %v1237, %v1031
  %v1259 = vmul.f32 %v1237, %v1238
  %1261 = vrot.lane.b32.xlu0 %v1259, 64
  %v1262 = vpop.permute.xlu0 %1261
  %v1264 = vadd.f32 %v1258, %v1262
  %v1265 = vtanh.pop %v1264
  %v1266 = vmul.f32 %v1257, %v1265
  %s1267 = scalar_lea.vmem %s0, 80
  %v1268 = vld [vmem:[%s1267] sm:$0xff]
  %v1269 = vld [vmem:[%s1267 + $0x8] sm:$0xff]
  %1270 = vmatpush.msra.mxu0 0.0
  %1271 = vmatpush.msra.mxu0 0.0
  %1272 = vmatpush.msra.mxu0 0.0
  %1273 = vmatpush.msra.mxu0 0.0
  %1274 = vmatpush.msra.mxu0 0.0
  %1275 = vmatpush.msra.mxu0 0.0
  %1276 = vmatpush.msra.mxu0 0.0
  %1277 = vmatpush.msra.mxu0 0.0
  %1278 = vmatpush.msra.mxu0 %v49
  %1279 = vmatpush.msra.mxu0 %v47
  %1280 = vmatpush.msra.mxu0 %v45
  %1281 = vmatpush.msra.mxu0 %v43
  %1282 = vmatpush.msra.mxu0 %v41
  %1283 = vmatpush.msra.mxu0 %v39
  %1284 = vmatpush.msra.mxu0 %v37
  %1285 = vmatpush.msra.mxu0 %v35
  %1286 = vmatmul.f32.gmra.mxu0 %v1175
  %v1287 = vpop.f32.mrf.mxu0
  %v1288 = vadd.f32 0.0, %v1287
  %1289 = vdwg.mxu0
  %1290 = vmatpush.msra.mxu0 0.0
  %1291 = vmatpush.msra.mxu0 0.0
  %1292 = vmatpush.msra.mxu0 0.0
  %1293 = vmatpush.msra.mxu0 0.0
  %1294 = vmatpush.msra.mxu0 0.0
  %1295 = vmatpush.msra.mxu0 0.0
  %1296 = vmatpush.msra.mxu0 0.0
  %1297 = vmatpush.msra.mxu0 0.0
  %1298 = vmatpush.msra.mxu0 %v50
  %1299 = vmatpush.msra.mxu0 %v48
  %1300 = vmatpush.msra.mxu0 %v46
  %1301 = vmatpush.msra.mxu0 %v44
  %1302 = vmatpush.msra.mxu0 %v42
  %1303 = vmatpush.msra.mxu0 %v40
  %1304 = vmatpush.msra.mxu0 %v38
  %1305 = vmatpush.msra.mxu0 %v36
  %1306 = vmatmul.f32.gmra.mxu0 %v1175
  %v1307 = vpop.f32.mrf.mxu0
  %v1308 = vadd.f32 0.0, %v1307
  %1309 = vdwg.mxu0
  %v1310 = vadd.f32 %v1268, %v1288
  %v1311 = vadd.f32 %v1269, %v1308
  %v1312 = vxor.u32 %v1310, 2147483648
  %v1313 = vmul.f32 %v1312, 1.442695
  %v1314 = vpow.pop %v1313
  %v1315 = vadd.f32 %v1314, 1.0
  %v1316 = vrcp.pop %v1315
  %v1317 = vmul.f32 %v1315, %v1316
  %v1318 = vsub.f32 1.0, %v1317
  %v1319 = vmul.f32 %v1316, %v1318
  %v1320 = vadd.f32 %v1316, %v1319
  %vm1321 = vweird.f32 %v1315
  %vm1322 = vweird.f32 %v1316
  %vm1323 = vmor %vm1321, %vm1322
  %v1324 = vsel %vm1323, %v1316, %v1320
  %v1325 = vand.u32 2147483647, %v1315
  %vm1326 = vcmp.eq.f32.partialorder %v1325, 8.507059e+37
  %v1327 = vand.u32 %v1315, 2147483648
  %v1328 = vor.u32 1.1754944e-38, %v1327
  %v1329 = vsel %vm1326, %v1328, %v1324
  %v1330 = vmul.f32 1.0, %v1329
  %v1331 = vtanh.pop %v1311
  %v1332 = vxor.u32 %v1311, 2147483648
  %v1333 = vmul.f32 %v1332, 1.442695
  %v1334 = vpow.pop %v1333
  %v1335 = vadd.f32 %v1334, 1.0
  %v1336 = vrcp.pop %v1335
  %v1337 = vmul.f32 %v1335, %v1336
  %v1338 = vsub.f32 1.0, %v1337
  %v1339 = vmul.f32 %v1336, %v1338
  %v1340 = vadd.f32 %v1336, %v1339
  %vm1341 = vweird.f32 %v1335
  %vm1342 = vweird.f32 %v1336
  %vm1343 = vmor %vm1341, %vm1342
  %v1344 = vsel %vm1343, %v1336, %v1340
  %v1345 = vand.u32 2147483647, %v1335
  %vm1346 = vcmp.eq.f32.partialorder %v1345, 8.507059e+37
  %v1347 = vand.u32 %v1335, 2147483648
  %v1348 = vor.u32 1.1754944e-38, %v1347
  %v1349 = vsel %vm1346, %v1348, %v1344
  %v1350 = vmul.f32 1.0, %v1349
  %v1351 = vmul.f32 %v1330, %v1124
  %v1352 = vmul.f32 %v1330, %v1331
  %1354 = vrot.lane.b32.xlu0 %v1352, 64
  %v1355 = vpop.permute.xlu0 %1354
  %v1357 = vadd.f32 %v1351, %v1355
  %v1358 = vtanh.pop %v1357
  %v1359 = vmul.f32 %v1350, %v1358
  %1361 = vrot.lane.b32.xlu0 %v1266, 64
  %v1362 = vpop.permute.xlu0 %1361
  %v1363 = vsel %vm95, %v1362, 0
  %1365 = vmatpush.msra.mxu0 0.0
  %1366 = vmatpush.msra.mxu0 0.0
  %1367 = vmatpush.msra.mxu0 0.0
  %1368 = vmatpush.msra.mxu0 0.0
  %1369 = vmatpush.msra.mxu0 0.0
  %1370 = vmatpush.msra.mxu0 0.0
  %1371 = vmatpush.msra.mxu0 0.0
  %1372 = vmatpush.msra.mxu0 0.0
  %1373 = vmatpush.msra.mxu0 %v81
  %1374 = vmatpush.msra.mxu0 %v79
  %1375 = vmatpush.msra.mxu0 %v77
  %1376 = vmatpush.msra.mxu0 %v75
  %1377 = vmatpush.msra.mxu0 %v73
  %1378 = vmatpush.msra.mxu0 %v71
  %1379 = vmatpush.msra.mxu0 %v69
  %1380 = vmatpush.msra.mxu0 %v67
  %1381 = vmatmul.f32.gmra.mxu0 %v1363
  %v1382 = vpop.f32.mrf.mxu0
  %v1383 = vadd.f32 0.0, %v1382
  %1384 = vdwg.mxu0
  %1385 = vmatpush.msra.mxu0 0.0
  %1386 = vmatpush.msra.mxu0 0.0
  %1387 = vmatpush.msra.mxu0 0.0
  %1388 = vmatpush.msra.mxu0 0.0
  %1389 = vmatpush.msra.mxu0 0.0
  %1390 = vmatpush.msra.mxu0 0.0
  %1391 = vmatpush.msra.mxu0 0.0
  %1392 = vmatpush.msra.mxu0 0.0
  %1393 = vmatpush.msra.mxu0 %v82
  %1394 = vmatpush.msra.mxu0 %v80
  %1395 = vmatpush.msra.mxu0 %v78
  %1396 = vmatpush.msra.mxu0 %v76
  %1397 = vmatpush.msra.mxu0 %v74
  %1398 = vmatpush.msra.mxu0 %v72
  %1399 = vmatpush.msra.mxu0 %v70
  %1400 = vmatpush.msra.mxu0 %v68
  %1401 = vmatmul.f32.gmra.mxu0 %v1363
  %v1402 = vpop.f32.mrf.mxu0
  %v1403 = vadd.f32 0.0, %v1402
  %1404 = vdwg.mxu0
  %1406 = vrot.lane.b32.xlu0 %v1359, 64
  %v1407 = vpop.permute.xlu0 %1406
  %v1408 = vsel %vm95, %v1407, 0
  %1410 = vmatpush.msra.mxu0 0.0
  %1411 = vmatpush.msra.mxu0 0.0
  %1412 = vmatpush.msra.mxu0 0.0
  %1413 = vmatpush.msra.mxu0 0.0
  %1414 = vmatpush.msra.mxu0 0.0
  %1415 = vmatpush.msra.mxu0 0.0
  %1416 = vmatpush.msra.mxu0 0.0
  %1417 = vmatpush.msra.mxu0 0.0
  %1418 = vmatpush.msra.mxu0 %v65
  %1419 = vmatpush.msra.mxu0 %v63
  %1420 = vmatpush.msra.mxu0 %v61
  %1421 = vmatpush.msra.mxu0 %v59
  %1422 = vmatpush.msra.mxu0 %v57
  %1423 = vmatpush.msra.mxu0 %v55
  %1424 = vmatpush.msra.mxu0 %v53
  %1425 = vmatpush.msra.mxu0 %v51
  %1426 = vmatmul.f32.gmra.mxu0 %v1408
  %v1427 = vpop.f32.mrf.mxu0
  %v1428 = vadd.f32 %v1383, %v1427
  %1429 = vdwg.mxu0
  %1430 = vmatpush.msra.mxu0 0.0
  %1431 = vmatpush.msra.mxu0 0.0
  %1432 = vmatpush.msra.mxu0 0.0
  %1433 = vmatpush.msra.mxu0 0.0
  %1434 = vmatpush.msra.mxu0 0.0
  %1435 = vmatpush.msra.mxu0 0.0
  %1436 = vmatpush.msra.mxu0 0.0
  %1437 = vmatpush.msra.mxu0 0.0
  %1438 = vmatpush.msra.mxu0 %v66
  %1439 = vmatpush.msra.mxu0 %v64
  %1440 = vmatpush.msra.mxu0 %v62
  %1441 = vmatpush.msra.mxu0 %v60
  %1442 = vmatpush.msra.mxu0 %v58
  %1443 = vmatpush.msra.mxu0 %v56
  %1444 = vmatpush.msra.mxu0 %v54
  %1445 = vmatpush.msra.mxu0 %v52
  %1446 = vmatmul.f32.gmra.mxu0 %v1408
  %v1447 = vpop.f32.mrf.mxu0
  %v1448 = vadd.f32 %v1403, %v1447
  %1449 = vdwg.mxu0
  %v1450 = vadd.f32 %v1428, %v85
  %v1451 = vadd.f32 %v1448, %v86
  %v1452 = vxor.u32 %v1450, 2147483648
  %v1453 = vmul.f32 %v1452, 1.442695
  %v1454 = vpow.pop %v1453
  %v1455 = vadd.f32 %v1454, 1.0
  %v1456 = vrcp.pop %v1455
  %v1457 = vmul.f32 %v1455, %v1456
  %v1458 = vsub.f32 1.0, %v1457
  %v1459 = vmul.f32 %v1456, %v1458
  %v1460 = vadd.f32 %v1456, %v1459
  %vm1461 = vweird.f32 %v1455
  %vm1462 = vweird.f32 %v1456
  %vm1463 = vmor %vm1461, %vm1462
  %v1464 = vsel %vm1463, %v1456, %v1460
  %v1465 = vand.u32 2147483647, %v1455
  %vm1466 = vcmp.eq.f32.partialorder %v1465, 8.507059e+37
  %v1467 = vand.u32 %v1455, 2147483648
  %v1468 = vor.u32 1.1754944e-38, %v1467
  %v1469 = vsel %vm1466, %v1468, %v1464
  %v1470 = vmul.f32 1.0, %v1469
  %v1471 = vtanh.pop %v1451
  %v1472 = vxor.u32 %v1451, 2147483648
  %v1473 = vmul.f32 %v1472, 1.442695
  %v1474 = vpow.pop %v1473
  %v1475 = vadd.f32 %v1474, 1.0
  %v1476 = vrcp.pop %v1475
  %v1477 = vmul.f32 %v1475, %v1476
  %v1478 = vsub.f32 1.0, %v1477
  %v1479 = vmul.f32 %v1476, %v1478
  %v1480 = vadd.f32 %v1476, %v1479
  %vm1481 = vweird.f32 %v1475
  %vm1482 = vweird.f32 %v1476
  %vm1483 = vmor %vm1481, %vm1482
  %v1484 = vsel %vm1483, %v1476, %v1480
  %v1485 = vand.u32 2147483647, %v1475
  %vm1486 = vcmp.eq.f32.partialorder %v1485, 8.507059e+37
  %v1487 = vand.u32 %v1475, 2147483648
  %v1488 = vor.u32 1.1754944e-38, %v1487
  %v1489 = vsel %vm1486, %v1488, %v1484
  %v1490 = vmul.f32 1.0, %v1489
  %v1491 = vmul.f32 %v1470, %v1264
  %v1492 = vmul.f32 %v1470, %v1471
  %1494 = vrot.lane.b32.xlu0 %v1492, 64
  %v1495 = vpop.permute.xlu0 %1494
  %v1497 = vadd.f32 %v1491, %v1495
  %v1498 = vtanh.pop %v1497
  %v1499 = vmul.f32 %v1490, %v1498
  %s1500 = scalar_lea.vmem %s0, 96
  %v1501 = vld [vmem:[%s1500] sm:$0xff]
  %v1502 = vld [vmem:[%s1500 + $0x8] sm:$0xff]
  %1503 = vmatpush.msra.mxu0 0.0
  %1504 = vmatpush.msra.mxu0 0.0
  %1505 = vmatpush.msra.mxu0 0.0
  %1506 = vmatpush.msra.mxu0 0.0
  %1507 = vmatpush.msra.mxu0 0.0
  %1508 = vmatpush.msra.mxu0 0.0
  %1509 = vmatpush.msra.mxu0 0.0
  %1510 = vmatpush.msra.mxu0 0.0
  %1511 = vmatpush.msra.mxu0 %v49
  %1512 = vmatpush.msra.mxu0 %v47
  %1513 = vmatpush.msra.mxu0 %v45
  %1514 = vmatpush.msra.mxu0 %v43
  %1515 = vmatpush.msra.mxu0 %v41
  %1516 = vmatpush.msra.mxu0 %v39
  %1517 = vmatpush.msra.mxu0 %v37
  %1518 = vmatpush.msra.mxu0 %v35
  %1519 = vmatmul.f32.gmra.mxu0 %v1408
  %v1520 = vpop.f32.mrf.mxu0
  %v1521 = vadd.f32 0.0, %v1520
  %1522 = vdwg.mxu0
  %1523 = vmatpush.msra.mxu0 0.0
  %1524 = vmatpush.msra.mxu0 0.0
  %1525 = vmatpush.msra.mxu0 0.0
  %1526 = vmatpush.msra.mxu0 0.0
  %1527 = vmatpush.msra.mxu0 0.0
  %1528 = vmatpush.msra.mxu0 0.0
  %1529 = vmatpush.msra.mxu0 0.0
  %1530 = vmatpush.msra.mxu0 0.0
  %1531 = vmatpush.msra.mxu0 %v50
  %1532 = vmatpush.msra.mxu0 %v48
  %1533 = vmatpush.msra.mxu0 %v46
  %1534 = vmatpush.msra.mxu0 %v44
  %1535 = vmatpush.msra.mxu0 %v42
  %1536 = vmatpush.msra.mxu0 %v40
  %1537 = vmatpush.msra.mxu0 %v38
  %1538 = vmatpush.msra.mxu0 %v36
  %1539 = vmatmul.f32.gmra.mxu0 %v1408
  %v1540 = vpop.f32.mrf.mxu0
  %v1541 = vadd.f32 0.0, %v1540
  %1542 = vdwg.mxu0
  %v1543 = vadd.f32 %v1501, %v1521
  %v1544 = vadd.f32 %v1502, %v1541
  %v1545 = vxor.u32 %v1543, 2147483648
  %v1546 = vmul.f32 %v1545, 1.442695
  %v1547 = vpow.pop %v1546
  %v1548 = vadd.f32 %v1547, 1.0
  %v1549 = vrcp.pop %v1548
  %v1550 = vmul.f32 %v1548, %v1549
  %v1551 = vsub.f32 1.0, %v1550
  %v1552 = vmul.f32 %v1549, %v1551
  %v1553 = vadd.f32 %v1549, %v1552
  %vm1554 = vweird.f32 %v1548
  %vm1555 = vweird.f32 %v1549
  %vm1556 = vmor %vm1554, %vm1555
  %v1557 = vsel %vm1556, %v1549, %v1553
  %v1558 = vand.u32 2147483647, %v1548
  %vm1559 = vcmp.eq.f32.partialorder %v1558, 8.507059e+37
  %v1560 = vand.u32 %v1548, 2147483648
  %v1561 = vor.u32 1.1754944e-38, %v1560
  %v1562 = vsel %vm1559, %v1561, %v1557
  %v1563 = vmul.f32 1.0, %v1562
  %v1564 = vtanh.pop %v1544
  %v1565 = vxor.u32 %v1544, 2147483648
  %v1566 = vmul.f32 %v1565, 1.442695
  %v1567 = vpow.pop %v1566
  %v1568 = vadd.f32 %v1567, 1.0
  %v1569 = vrcp.pop %v1568
  %v1570 = vmul.f32 %v1568, %v1569
  %v1571 = vsub.f32 1.0, %v1570
  %v1572 = vmul.f32 %v1569, %v1571
  %v1573 = vadd.f32 %v1569, %v1572
  %vm1574 = vweird.f32 %v1568
  %vm1575 = vweird.f32 %v1569
  %vm1576 = vmor %vm1574, %vm1575
  %v1577 = vsel %vm1576, %v1569, %v1573
  %v1578 = vand.u32 2147483647, %v1568
  %vm1579 = vcmp.eq.f32.partialorder %v1578, 8.507059e+37
  %v1580 = vand.u32 %v1568, 2147483648
  %v1581 = vor.u32 1.1754944e-38, %v1580
  %v1582 = vsel %vm1579, %v1581, %v1577
  %v1583 = vmul.f32 1.0, %v1582
  %v1584 = vmul.f32 %v1563, %v1357
  %v1585 = vmul.f32 %v1563, %v1564
  %1587 = vrot.lane.b32.xlu0 %v1585, 64
  %v1588 = vpop.permute.xlu0 %1587
  %v1590 = vadd.f32 %v1584, %v1588
  %v1591 = vtanh.pop %v1590
  %v1592 = vmul.f32 %v1583, %v1591
  %1594 = vrot.lane.b32.xlu0 %v1499, 64
  %v1595 = vpop.permute.xlu0 %1594
  %v1596 = vsel %vm95, %v1595, 0
  %1598 = vmatpush.msra.mxu0 0.0
  %1599 = vmatpush.msra.mxu0 0.0
  %1600 = vmatpush.msra.mxu0 0.0
  %1601 = vmatpush.msra.mxu0 0.0
  %1602 = vmatpush.msra.mxu0 0.0
  %1603 = vmatpush.msra.mxu0 0.0
  %1604 = vmatpush.msra.mxu0 0.0
  %1605 = vmatpush.msra.mxu0 0.0
  %1606 = vmatpush.msra.mxu0 %v81
  %1607 = vmatpush.msra.mxu0 %v79
  %1608 = vmatpush.msra.mxu0 %v77
  %1609 = vmatpush.msra.mxu0 %v75
  %1610 = vmatpush.msra.mxu0 %v73
  %1611 = vmatpush.msra.mxu0 %v71
  %1612 = vmatpush.msra.mxu0 %v69
  %1613 = vmatpush.msra.mxu0 %v67
  %1614 = vmatmul.f32.gmra.mxu0 %v1596
  %v1615 = vpop.f32.mrf.mxu0
  %v1616 = vadd.f32 0.0, %v1615
  %1617 = vdwg.mxu0
  %1618 = vmatpush.msra.mxu0 0.0
  %1619 = vmatpush.msra.mxu0 0.0
  %1620 = vmatpush.msra.mxu0 0.0
  %1621 = vmatpush.msra.mxu0 0.0
  %1622 = vmatpush.msra.mxu0 0.0
  %1623 = vmatpush.msra.mxu0 0.0
  %1624 = vmatpush.msra.mxu0 0.0
  %1625 = vmatpush.msra.mxu0 0.0
  %1626 = vmatpush.msra.mxu0 %v82
  %1627 = vmatpush.msra.mxu0 %v80
  %1628 = vmatpush.msra.mxu0 %v78
  %1629 = vmatpush.msra.mxu0 %v76
  %1630 = vmatpush.msra.mxu0 %v74
  %1631 = vmatpush.msra.mxu0 %v72
  %1632 = vmatpush.msra.mxu0 %v70
  %1633 = vmatpush.msra.mxu0 %v68
  %1634 = vmatmul.f32.gmra.mxu0 %v1596
  %v1635 = vpop.f32.mrf.mxu0
  %v1636 = vadd.f32 0.0, %v1635
  %1637 = vdwg.mxu0
  %1639 = vrot.lane.b32.xlu0 %v1592, 64
  %v1640 = vpop.permute.xlu0 %1639
  %v1641 = vsel %vm95, %v1640, 0
  %1643 = vmatpush.msra.mxu0 0.0
  %1644 = vmatpush.msra.mxu0 0.0
  %1645 = vmatpush.msra.mxu0 0.0
  %1646 = vmatpush.msra.mxu0 0.0
  %1647 = vmatpush.msra.mxu0 0.0
  %1648 = vmatpush.msra.mxu0 0.0
  %1649 = vmatpush.msra.mxu0 0.0
  %1650 = vmatpush.msra.mxu0 0.0
  %1651 = vmatpush.msra.mxu0 %v65
  %1652 = vmatpush.msra.mxu0 %v63
  %1653 = vmatpush.msra.mxu0 %v61
  %1654 = vmatpush.msra.mxu0 %v59
  %1655 = vmatpush.msra.mxu0 %v57
  %1656 = vmatpush.msra.mxu0 %v55
  %1657 = vmatpush.msra.mxu0 %v53
  %1658 = vmatpush.msra.mxu0 %v51
  %1659 = vmatmul.f32.gmra.mxu0 %v1641
  %v1660 = vpop.f32.mrf.mxu0
  %v1661 = vadd.f32 %v1616, %v1660
  %1662 = vdwg.mxu0
  %1663 = vmatpush.msra.mxu0 0.0
  %1664 = vmatpush.msra.mxu0 0.0
  %1665 = vmatpush.msra.mxu0 0.0
  %1666 = vmatpush.msra.mxu0 0.0
  %1667 = vmatpush.msra.mxu0 0.0
  %1668 = vmatpush.msra.mxu0 0.0
  %1669 = vmatpush.msra.mxu0 0.0
  %1670 = vmatpush.msra.mxu0 0.0
  %1671 = vmatpush.msra.mxu0 %v66
  %1672 = vmatpush.msra.mxu0 %v64
  %1673 = vmatpush.msra.mxu0 %v62
  %1674 = vmatpush.msra.mxu0 %v60
  %1675 = vmatpush.msra.mxu0 %v58
  %1676 = vmatpush.msra.mxu0 %v56
  %1677 = vmatpush.msra.mxu0 %v54
  %1678 = vmatpush.msra.mxu0 %v52
  %1679 = vmatmul.f32.gmra.mxu0 %v1641
  %v1680 = vpop.f32.mrf.mxu0
  %v1681 = vadd.f32 %v1636, %v1680
  %1682 = vdwg.mxu0
  %v1683 = vadd.f32 %v1661, %v85
  %v1684 = vadd.f32 %v1681, %v86
  %v1685 = vxor.u32 %v1683, 2147483648
  %v1686 = vmul.f32 %v1685, 1.442695
  %v1687 = vpow.pop %v1686
  %v1688 = vadd.f32 %v1687, 1.0
  %v1689 = vrcp.pop %v1688
  %v1690 = vmul.f32 %v1688, %v1689
  %v1691 = vsub.f32 1.0, %v1690
  %v1692 = vmul.f32 %v1689, %v1691
  %v1693 = vadd.f32 %v1689, %v1692
  %vm1694 = vweird.f32 %v1688
  %vm1695 = vweird.f32 %v1689
  %vm1696 = vmor %vm1694, %vm1695
  %v1697 = vsel %vm1696, %v1689, %v1693
  %v1698 = vand.u32 2147483647, %v1688
  %vm1699 = vcmp.eq.f32.partialorder %v1698, 8.507059e+37
  %v1700 = vand.u32 %v1688, 2147483648
  %v1701 = vor.u32 1.1754944e-38, %v1700
  %v1702 = vsel %vm1699, %v1701, %v1697
  %v1703 = vmul.f32 1.0, %v1702
  %v1704 = vtanh.pop %v1684
  %v1705 = vxor.u32 %v1684, 2147483648
  %v1706 = vmul.f32 %v1705, 1.442695
  %v1707 = vpow.pop %v1706
  %v1708 = vadd.f32 %v1707, 1.0
  %v1709 = vrcp.pop %v1708
  %v1710 = vmul.f32 %v1708, %v1709
  %v1711 = vsub.f32 1.0, %v1710
  %v1712 = vmul.f32 %v1709, %v1711
  %v1713 = vadd.f32 %v1709, %v1712
  %vm1714 = vweird.f32 %v1708
  %vm1715 = vweird.f32 %v1709
  %vm1716 = vmor %vm1714, %vm1715
  %v1717 = vsel %vm1716, %v1709, %v1713
  %v1718 = vand.u32 2147483647, %v1708
  %vm1719 = vcmp.eq.f32.partialorder %v1718, 8.507059e+37
  %v1720 = vand.u32 %v1708, 2147483648
  %v1721 = vor.u32 1.1754944e-38, %v1720
  %v1722 = vsel %vm1719, %v1721, %v1717
  %v1723 = vmul.f32 1.0, %v1722
  %v1724 = vmul.f32 %v1703, %v1497
  %v1725 = vmul.f32 %v1703, %v1704
  %1727 = vrot.lane.b32.xlu0 %v1725, 64
  %v1728 = vpop.permute.xlu0 %1727
  %v1730 = vadd.f32 %v1724, %v1728
  %v1731 = vtanh.pop %v1730
  %v1732 = vmul.f32 %v1723, %v1731
  %s1733 = scalar_lea.vmem %s0, 112
  %v1734 = vld [vmem:[%s1733] sm:$0xff]
  %v1735 = vld [vmem:[%s1733 + $0x8] sm:$0xff]
  %1736 = vmatpush.msra.mxu0 0.0
  %1737 = vmatpush.msra.mxu0 0.0
  %1738 = vmatpush.msra.mxu0 0.0
  %1739 = vmatpush.msra.mxu0 0.0
  %1740 = vmatpush.msra.mxu0 0.0
  %1741 = vmatpush.msra.mxu0 0.0
  %1742 = vmatpush.msra.mxu0 0.0
  %1743 = vmatpush.msra.mxu0 0.0
  %1744 = vmatpush.msra.mxu0 %v49
  %1745 = vmatpush.msra.mxu0 %v47
  %1746 = vmatpush.msra.mxu0 %v45
  %1747 = vmatpush.msra.mxu0 %v43
  %1748 = vmatpush.msra.mxu0 %v41
  %1749 = vmatpush.msra.mxu0 %v39
  %1750 = vmatpush.msra.mxu0 %v37
  %1751 = vmatpush.msra.mxu0 %v35
  %1752 = vmatmul.f32.gmra.mxu0 %v1641
  %v1753 = vpop.f32.mrf.mxu0
  %v1754 = vadd.f32 0.0, %v1753
  %1755 = vdwg.mxu0
  %1756 = vmatpush.msra.mxu0 0.0
  %1757 = vmatpush.msra.mxu0 0.0
  %1758 = vmatpush.msra.mxu0 0.0
  %1759 = vmatpush.msra.mxu0 0.0
  %1760 = vmatpush.msra.mxu0 0.0
  %1761 = vmatpush.msra.mxu0 0.0
  %1762 = vmatpush.msra.mxu0 0.0
  %1763 = vmatpush.msra.mxu0 0.0
  %1764 = vmatpush.msra.mxu0 %v50
  %1765 = vmatpush.msra.mxu0 %v48
  %1766 = vmatpush.msra.mxu0 %v46
  %1767 = vmatpush.msra.mxu0 %v44
  %1768 = vmatpush.msra.mxu0 %v42
  %1769 = vmatpush.msra.mxu0 %v40
  %1770 = vmatpush.msra.mxu0 %v38
  %1771 = vmatpush.msra.mxu0 %v36
  %1772 = vmatmul.f32.gmra.mxu0 %v1641
  %v1773 = vpop.f32.mrf.mxu0
  %v1774 = vadd.f32 0.0, %v1773
  %1775 = vdwg.mxu0
  %v1776 = vadd.f32 %v1734, %v1754
  %v1777 = vadd.f32 %v1735, %v1774
  %v1778 = vxor.u32 %v1776, 2147483648
  %v1779 = vmul.f32 %v1778, 1.442695
  %v1780 = vpow.pop %v1779
  %v1781 = vadd.f32 %v1780, 1.0
  %v1782 = vrcp.pop %v1781
  %v1783 = vmul.f32 %v1781, %v1782
  %v1784 = vsub.f32 1.0, %v1783
  %v1785 = vmul.f32 %v1782, %v1784
  %v1786 = vadd.f32 %v1782, %v1785
  %vm1787 = vweird.f32 %v1781
  %vm1788 = vweird.f32 %v1782
  %vm1789 = vmor %vm1787, %vm1788
  %v1790 = vsel %vm1789, %v1782, %v1786
  %v1791 = vand.u32 2147483647, %v1781
  %vm1792 = vcmp.eq.f32.partialorder %v1791, 8.507059e+37
  %v1793 = vand.u32 %v1781, 2147483648
  %v1794 = vor.u32 1.1754944e-38, %v1793
  %v1795 = vsel %vm1792, %v1794, %v1790
  %v1796 = vmul.f32 1.0, %v1795
  %v1797 = vtanh.pop %v1777
  %v1798 = vxor.u32 %v1777, 2147483648
  %v1799 = vmul.f32 %v1798, 1.442695
  %v1800 = vpow.pop %v1799
  %v1801 = vadd.f32 %v1800, 1.0
  %v1802 = vrcp.pop %v1801
  %v1803 = vmul.f32 %v1801, %v1802
  %v1804 = vsub.f32 1.0, %v1803
  %v1805 = vmul.f32 %v1802, %v1804
  %v1806 = vadd.f32 %v1802, %v1805
  %vm1807 = vweird.f32 %v1801
  %vm1808 = vweird.f32 %v1802
  %vm1809 = vmor %vm1807, %vm1808
  %v1810 = vsel %vm1809, %v1802, %v1806
  %v1811 = vand.u32 2147483647, %v1801
  %vm1812 = vcmp.eq.f32.partialorder %v1811, 8.507059e+37
  %v1813 = vand.u32 %v1801, 2147483648
  %v1814 = vor.u32 1.1754944e-38, %v1813
  %v1815 = vsel %vm1812, %v1814, %v1810
  %v1816 = vmul.f32 1.0, %v1815
  %v1817 = vmul.f32 %v1796, %v1590
  %v1818 = vmul.f32 %v1796, %v1797
  %1820 = vrot.lane.b32.xlu0 %v1818, 64
  %v1821 = vpop.permute.xlu0 %1820
  %v1823 = vadd.f32 %v1817, %v1821
  %v1824 = vtanh.pop %v1823
  %v1825 = vmul.f32 %v1816, %v1824
  %1827 = vrot.lane.b32.xlu0 %v1732, 64
  %v1828 = vpop.permute.xlu0 %1827
  %v1829 = vsel %vm95, %v1828, 0
  %1831 = vmatpush.msra.mxu0 0.0
  %1832 = vmatpush.msra.mxu0 0.0
  %1833 = vmatpush.msra.mxu0 0.0
  %1834 = vmatpush.msra.mxu0 0.0
  %1835 = vmatpush.msra.mxu0 0.0
  %1836 = vmatpush.msra.mxu0 0.0
  %1837 = vmatpush.msra.mxu0 0.0
  %1838 = vmatpush.msra.mxu0 0.0
  %1839 = vmatpush.msra.mxu0 %v81
  %1840 = vmatpush.msra.mxu0 %v79
  %1841 = vmatpush.msra.mxu0 %v77
  %1842 = vmatpush.msra.mxu0 %v75
  %1843 = vmatpush.msra.mxu0 %v73
  %1844 = vmatpush.msra.mxu0 %v71
  %1845 = vmatpush.msra.mxu0 %v69
  %1846 = vmatpush.msra.mxu0 %v67
  %1847 = vmatmul.f32.gmra.mxu0 %v1829
  %v1848 = vpop.f32.mrf.mxu0
  %v1849 = vadd.f32 0.0, %v1848
  %1850 = vdwg.mxu0
  %1851 = vmatpush.msra.mxu0 0.0
  %1852 = vmatpush.msra.mxu0 0.0
  %1853 = vmatpush.msra.mxu0 0.0
  %1854 = vmatpush.msra.mxu0 0.0
  %1855 = vmatpush.msra.mxu0 0.0
  %1856 = vmatpush.msra.mxu0 0.0
  %1857 = vmatpush.msra.mxu0 0.0
  %1858 = vmatpush.msra.mxu0 0.0
  %1859 = vmatpush.msra.mxu0 %v82
  %1860 = vmatpush.msra.mxu0 %v80
  %1861 = vmatpush.msra.mxu0 %v78
  %1862 = vmatpush.msra.mxu0 %v76
  %1863 = vmatpush.msra.mxu0 %v74
  %1864 = vmatpush.msra.mxu0 %v72
  %1865 = vmatpush.msra.mxu0 %v70
  %1866 = vmatpush.msra.mxu0 %v68
  %1867 = vmatmul.f32.gmra.mxu0 %v1829
  %v1868 = vpop.f32.mrf.mxu0
  %v1869 = vadd.f32 0.0, %v1868
  %1870 = vdwg.mxu0
  %1872 = vrot.lane.b32.xlu0 %v1825, 64
  %v1873 = vpop.permute.xlu0 %1872
  %v1874 = vsel %vm95, %v1873, 0
  %1876 = vmatpush.msra.mxu0 0.0
  %1877 = vmatpush.msra.mxu0 0.0
  %1878 = vmatpush.msra.mxu0 0.0
  %1879 = vmatpush.msra.mxu0 0.0
  %1880 = vmatpush.msra.mxu0 0.0
  %1881 = vmatpush.msra.mxu0 0.0
  %1882 = vmatpush.msra.mxu0 0.0
  %1883 = vmatpush.msra.mxu0 0.0
  %1884 = vmatpush.msra.mxu0 %v65
  %1885 = vmatpush.msra.mxu0 %v63
  %1886 = vmatpush.msra.mxu0 %v61
  %1887 = vmatpush.msra.mxu0 %v59
  %1888 = vmatpush.msra.mxu0 %v57
  %1889 = vmatpush.msra.mxu0 %v55
  %1890 = vmatpush.msra.mxu0 %v53
  %1891 = vmatpush.msra.mxu0 %v51
  %1892 = vmatmul.f32.gmra.mxu0 %v1874
  %v1893 = vpop.f32.mrf.mxu0
  %v1894 = vadd.f32 %v1849, %v1893
  %1895 = vdwg.mxu0
  %1896 = vmatpush.msra.mxu0 0.0
  %1897 = vmatpush.msra.mxu0 0.0
  %1898 = vmatpush.msra.mxu0 0.0
  %1899 = vmatpush.msra.mxu0 0.0
  %1900 = vmatpush.msra.mxu0 0.0
  %1901 = vmatpush.msra.mxu0 0.0
  %1902 = vmatpush.msra.mxu0 0.0
  %1903 = vmatpush.msra.mxu0 0.0
  %1904 = vmatpush.msra.mxu0 %v66
  %1905 = vmatpush.msra.mxu0 %v64
  %1906 = vmatpush.msra.mxu0 %v62
  %1907 = vmatpush.msra.mxu0 %v60
  %1908 = vmatpush.msra.mxu0 %v58
  %1909 = vmatpush.msra.mxu0 %v56
  %1910 = vmatpush.msra.mxu0 %v54
  %1911 = vmatpush.msra.mxu0 %v52
  %1912 = vmatmul.f32.gmra.mxu0 %v1874
  %v1913 = vpop.f32.mrf.mxu0
  %v1914 = vadd.f32 %v1869, %v1913
  %1915 = vdwg.mxu0
  %v1916 = vadd.f32 %v1894, %v85
  %v1917 = vadd.f32 %v1914, %v86
  %v1918 = vxor.u32 %v1916, 2147483648
  %v1919 = vmul.f32 %v1918, 1.442695
  %v1920 = vpow.pop %v1919
  %v1921 = vadd.f32 %v1920, 1.0
  %v1922 = vrcp.pop %v1921
  %v1923 = vmul.f32 %v1921, %v1922
  %v1924 = vsub.f32 1.0, %v1923
  %v1925 = vmul.f32 %v1922, %v1924
  %v1926 = vadd.f32 %v1922, %v1925
  %vm1927 = vweird.f32 %v1921
  %vm1928 = vweird.f32 %v1922
  %vm1929 = vmor %vm1927, %vm1928
  %v1930 = vsel %vm1929, %v1922, %v1926
  %v1931 = vand.u32 2147483647, %v1921
  %vm1932 = vcmp.eq.f32.partialorder %v1931, 8.507059e+37
  %v1933 = vand.u32 %v1921, 2147483648
  %v1934 = vor.u32 1.1754944e-38, %v1933
  %v1935 = vsel %vm1932, %v1934, %v1930
  %v1936 = vmul.f32 1.0, %v1935
  %v1937 = vtanh.pop %v1917
  %v1938 = vxor.u32 %v1917, 2147483648
  %v1939 = vmul.f32 %v1938, 1.442695
  %v1940 = vpow.pop %v1939
  %v1941 = vadd.f32 %v1940, 1.0
  %v1942 = vrcp.pop %v1941
  %v1943 = vmul.f32 %v1941, %v1942
  %v1944 = vsub.f32 1.0, %v1943
  %v1945 = vmul.f32 %v1942, %v1944
  %v1946 = vadd.f32 %v1942, %v1945
  %vm1947 = vweird.f32 %v1941
  %vm1948 = vweird.f32 %v1942
  %vm1949 = vmor %vm1947, %vm1948
  %v1950 = vsel %vm1949, %v1942, %v1946
  %v1951 = vand.u32 2147483647, %v1941
  %vm1952 = vcmp.eq.f32.partialorder %v1951, 8.507059e+37
  %v1953 = vand.u32 %v1941, 2147483648
  %v1954 = vor.u32 1.1754944e-38, %v1953
  %v1955 = vsel %vm1952, %v1954, %v1950
  %v1956 = vmul.f32 1.0, %v1955
  %v1957 = vmul.f32 %v1936, %v1730
  %v1958 = vmul.f32 %v1936, %v1937
  %1960 = vrot.lane.b32.xlu0 %v1958, 64
  %v1961 = vpop.permute.xlu0 %1960
  %v1963 = vadd.f32 %v1957, %v1961
  %v1964 = vtanh.pop %v1963
  %v1965 = vmul.f32 %v1956, %v1964
  %1967 = vst.msk [vmem:[#allocation2] sm:$0xff] %vm95, %v1873
  %1969 = vrot.lane.b32.xlu0 %v1823, 64
  %v1970 = vpop.permute.xlu0 %1969
  %1972 = vst.msk [vmem:[#allocation3] sm:$0xff] %vm95, %v1970
  %1974 = vrot.lane.b32.xlu0 %v1965, 64
  %v1975 = vpop.permute.xlu0 %1974
  %1977 = vst.msk [vmem:[#allocation4] sm:$0xff] %vm95, %v1975
  %1979 = vrot.lane.b32.xlu0 %v1963, 64
  %v1980 = vpop.permute.xlu0 %1979
  %1982 = vst.msk [vmem:[#allocation5] sm:$0xff] %vm95, %v1980
  // Predicated region
  $region34: #{audio_lstm_forward.1} parent=0 // pred_check
    %p1983 = pneg %p26
  $region35: #{audio_lstm_forward.1} parent=0 // pred_check_branch
    %1985 = sbr.rel (%p1983) target = $region37
  $region36: #{audio_lstm_forward.1} parent=0 // pred_region
    %v1986 = vld [vmem:[%s5] sm:$0xff]
    %v1987 = vld [vmem:[%s5 + $0x8] sm:$0xff]
    %v1988 = vld [vmem:[%s5 + $0x10] sm:$0xff]
    %v1989 = vld [vmem:[%s5 + $0x18] sm:$0xff]
    %v1990 = vld [vmem:[%s5 + $0x20] sm:$0xff]
    %v1991 = vld [vmem:[%s5 + $0x28] sm:$0xff]
    %v1992 = vld [vmem:[%s5 + $0x30] sm:$0xff]
    %v1993 = vld [vmem:[%s5 + $0x38] sm:$0xff]
    %v1994 = vld [vmem:[%s6] sm:$0x1]
    %v1996 = vperm.slane %v1994, 0
    %v1998 = vsel %vm95, %v1975, 0
    %2000 = vmatpush.msra.mxu0 0.0
    %2001 = vmatpush.msra.mxu0 0.0
    %2002 = vmatpush.msra.mxu0 0.0
    %2003 = vmatpush.msra.mxu0 0.0
    %2004 = vmatpush.msra.mxu0 0.0
    %2005 = vmatpush.msra.mxu0 0.0
    %2006 = vmatpush.msra.mxu0 0.0
    %2007 = vmatpush.msra.mxu0 0.0
    %2008 = vmatpush.msra.mxu0 %v1993
    %2009 = vmatpush.msra.mxu0 %v1992
    %2010 = vmatpush.msra.mxu0 %v1991
    %2011 = vmatpush.msra.mxu0 %v1990
    %2012 = vmatpush.msra.mxu0 %v1989
    %2013 = vmatpush.msra.mxu0 %v1988
    %2014 = vmatpush.msra.mxu0 %v1987
    %2015 = vmatpush.msra.mxu0 %v1986
    %2016 = vmatmul.f32.gmra.mxu0 %v1998
    %v2017 = vpop.f32.mrf.mxu0
    %v2018 = vadd.f32 %v1996, %v2017
    %2019 = vdwg.mxu0
    %2020 = vmax.xlane.f32.xlu0 %v2018
    %v2021 = vpop.xlane.xlu0 %2020
    %v2022 = vsub.f32 %v2018, %v2021
    %v2023 = vmul.f32 %v2022, 1.442695
    %v2024 = vpow.pop %v2023
    %2025 = vadd.xlane.f32.xlu0 %v2024
    %v2026 = vpop.xlane.xlu0 %2025
    %v2027 = vlog2.pop %v2026
    %v2028 = vmul.f32 %v2027, 0.6931472
    %v2029 = vsub.f32 %v2022, %v2028
    %2030 = vst [vmem:[%s7] sm:$0xff] %v2029
  $region37: #{audio_lstm_forward.1} parent=0 // pred_fallthru
    _
  // Predicated region
  $region38: #{audio_lstm_forward.1} parent=0 // pred_check
    _
  $region39: #{audio_lstm_forward.1} parent=0 // pred_check_branch
    %2032 = sbr.rel (0) target = $region41
  $region40: #{audio_lstm_forward.1} parent=0 // pred_region
    _
  $region41: #{audio_lstm_forward.1} parent=0 // pred_fallthru
    _
  // Predicated region
  $region42: #{audio_lstm_forward.1} parent=0 // pred_check
    _
  $region43: #{audio_lstm_forward.1} parent=0 // pred_check_branch
    %2034 = sbr.rel (0) target = $region45
  $region44: #{audio_lstm_forward.1} parent=0 // pred_region
    _
  $region45: #{audio_lstm_forward.1} parent=0 // pred_fallthru
    _

</llo_original>
